<compile_context>
chip_gen: v6e
topology: v6e:2x2x1
jax: 0.10.0
libtpu: 0.0.40
codegen_flags: <defaults>
</compile_context>

<pallas_src>
import numpy as np
import jax
import jax.numpy as jnp
from jax.experimental import pallas as pl
from jax.experimental.pallas import tpu as pltpu

ELEM_LIST = list(range(1, 119))
ATOM_FDIM = len(ELEM_LIST) + 6 + 5 + 4 + 5 + 1   # 139
BOND_FDIM = 5 + 6                                # 11
BOND_IN_FDIM = ATOM_FDIM + BOND_FDIM             # 150 (atom_messages=False)

HIDDEN = 32
DEPTH = 3
H_PAD = 128        # hidden dim zero-padded to a full lane width (lane-dense stores)
LANE = 128
SUB = 8


def _round_up(x, m):
    return (x + m - 1) // m * m


# ----------------------------------------------------------------------------
# Pallas kernel: full MPNEncoder forward (bond messages, ReLU, mean pooling)
# ----------------------------------------------------------------------------
def mpn_kernel(f_bonds_ref, f_atoms_ref, m_msg_ref, agg_ref, scope_ref,
               w_i_ref, w_h_ref, w_o_atom_ref, w_o_msg_ref, b_o_ref, out_ref):
    # Selection / count matrices arrive as bf16 (exact small-int values); cast to
    # f32 in VMEM, accumulate everything in f32 on the MXU.
    m_msg = m_msg_ref[...].astype(jnp.float32)   # (Nb, Nb) = sel_b2a @ agg - sel_rev
    agg = agg_ref[...].astype(jnp.float32)       # (Na, Nb): agg[a,b] = count of b in a2b[a]

    f_bonds = f_bonds_ref[...]
    f_atoms = f_atoms_ref[...]
    w_i = w_i_ref[...]
    w_h = w_h_ref[...]

    # input = W_i(f_bonds); message = ReLU(input)
    inp = jnp.dot(f_bonds, w_i, preferred_element_type=jnp.float32)
    message = jnp.maximum(inp, 0.0)

    for _ in range(DEPTH - 1):
        # index_select_ND(message, a2b).sum(1)[b2a] - message[b2revb]  ==  m_msg @ message
        message = jnp.dot(m_msg, message, preferred_element_type=jnp.float32)
        message = jnp.dot(message, w_h, preferred_element_type=jnp.float32)
        message = jnp.maximum(inp + message, 0.0)
        # dropout(p=0) == identity at eval  # TODO(synk): stochastic dropout omitted (p=0)

    # final aggregation into atoms
    a_message = jnp.dot(agg, message, preferred_element_type=jnp.float32)
    # W_o(cat([f_atoms, a_message])) split into two matmuls (avoids lane concat)
    a_hidden = (jnp.dot(f_atoms, w_o_atom_ref[...], preferred_element_type=jnp.float32)
                + jnp.dot(a_message, w_o_msg_ref[...], preferred_element_type=jnp.float32)
                + b_o_ref[...])
    atom_hiddens = jnp.maximum(a_hidden, 0.0)

    # per-molecule mean pooling: scope[i, a] = 1/a_size for atoms of molecule i
    out_ref[...] = jnp.dot(scope_ref[...], atom_hiddens,
                           preferred_element_type=jnp.float32)


def mpn_forward(f_bonds, f_atoms, m_msg, agg, scope,
                w_i, w_h, w_o_atom, w_o_msg, b_o):
    mp = scope.shape[0]
    args = (f_bonds, f_atoms, m_msg, agg, scope, w_i, w_h, w_o_atom, w_o_msg, b_o)

    out_bytes = mp * H_PAD * 4
    in_bytes = sum(int(np.prod(a.shape)) * int(a.dtype.itemsize) for a in args)
    # Single-shot call (no grid pipelining): everything resident once in VMEM;
    # give the compiler 2x headroom for temporaries, plus a fixed margin.
    vmem_limit = int(min(2 * (in_bytes + out_bytes) + (8 << 20), 100 << 20))

    nb, db = f_bonds.shape
    na, da = f_atoms.shape
    flops = 2 * (nb * db * H_PAD
                 + (DEPTH - 1) * (nb * nb * H_PAD + nb * H_PAD * H_PAD)
                 + na * nb * H_PAD + na * da * H_PAD + na * H_PAD * H_PAD
                 + mp * na * H_PAD)
    cost = pl.CostEstimate(flops=int(flops), transcendentals=0,
                           bytes_accessed=int(in_bytes + out_bytes))

    vmem = pl.BlockSpec(memory_space=pltpu.MemorySpace.VMEM)
    return pl.pallas_call(
        mpn_kernel,
        out_shape=jax.ShapeDtypeStruct((mp, H_PAD), jnp.float32),
        in_specs=[vmem] * len(args),
        out_specs=vmem,
        compiler_params=pltpu.CompilerParams(vmem_limit_bytes=vmem_limit),
        cost_estimate=cost,
    )(*args)


# ----------------------------------------------------------------------------
# Synthetic BatchMolGraph (chain molecules) with chemprop index conventions
# ----------------------------------------------------------------------------
def build_chain_batch(atoms_per_mol):
    n_atoms, n_bonds = 1, 1          # index 0 is the zero-padding row
    a2b = [[]]
    b2a = [0]
    b2revb = [0]
    a_scope = []
    for na in atoms_per_mol:
        a_scope.append((n_atoms, na))
        for _ in range(na):
            a2b.append([])
        for a1 in range(na - 1):
            a2 = a1 + 1
            ga1, ga2 = n_atoms + a1, n_atoms + a2
            b1, b2 = n_bonds, n_bonds + 1
            a2b[ga2].append(b1)
            b2a.append(ga1)
            a2b[ga1].append(b2)
            b2a.append(ga2)
            b2revb.append(b2)
            b2revb.append(b1)
            n_bonds += 2
        n_atoms += na
    max_nb = max(len(r) for r in a2b)
    a2b_pad = np.array([r + [0] * (max_nb - len(r)) for r in a2b], dtype=np.int32)
    return (n_atoms, n_bonds, a2b_pad,
            np.array(b2a, dtype=np.int32),
            np.array(b2revb, dtype=np.int32), a_scope)


def reference_forward(f_atoms, f_bonds, a2b, b2a, b2revb, a_scope,
                      w_i, w_h, w_o_full, b_o):
    """Plain-numpy transcription of MPNEncoder.forward (torch semantics)."""
    inp = f_bonds @ w_i
    message = np.maximum(inp, 0.0)
    for _ in range(DEPTH - 1):
        nei_a_message = message[a2b]              # (Na, max_nb, H)
        a_message = nei_a_message.sum(axis=1)
        rev_message = message[b2revb]
        message = a_message[b2a] - rev_message
        message = message @ w_h
        message = np.maximum(inp + message, 0.0)
    nei_a_message = message[a2b]
    a_message = nei_a_message.sum(axis=1)
    a_input = np.concatenate([f_atoms, a_message], axis=1)
    atom_hiddens = np.maximum(a_input @ w_o_full + b_o, 0.0)
    mol_vecs = []
    for a_start, a_size in a_scope:
        mol_vecs.append(atom_hiddens[a_start:a_start + a_size].sum(axis=0) / a_size)
    return np.stack(mol_vecs, axis=0)


if __name__ == "__main__":
    key = jax.random.PRNGKey(0)
    k_fa, k_fb, k_wi, k_wh, k_wo, k_bo = jax.random.split(key, 6)

    atoms_per_mol = (5, 6)           # 2 small "molecules" (chains)
    n_mols = len(atoms_per_mol)
    n_atoms, n_bonds, a2b, b2a, b2revb, a_scope = build_chain_batch(atoms_per_mol)

    # --- features (deterministic, synthetic). np.array(...) copies -> writable ---
    f_atoms = np.array(jax.random.uniform(k_fa, (n_atoms, ATOM_FDIM)), dtype=np.float32)
    f_atoms[0] = 0.0
    bond_raw = np.array(jax.random.uniform(k_fb, (n_bonds, BOND_FDIM)), dtype=np.float32)
    f_bonds = np.zeros((n_bonds, BOND_IN_FDIM), np.float32)
    for b in range(1, n_bonds):      # chemprop: f_bonds[b] = f_atoms[b2a[b]] ++ bond_feat
        f_bonds[b] = np.concatenate([f_atoms[b2a[b]], bond_raw[b]])

    # --- weights (deterministic init; W_i / W_h bias-free, W_o with bias) ---
    # out-of-place scaling (jax-derived numpy arrays may be read-only)
    w_i_t = np.array(jax.random.normal(k_wi, (BOND_IN_FDIM, HIDDEN)),
                     dtype=np.float32) / np.sqrt(BOND_IN_FDIM).astype(np.float32)
    w_h_t = np.array(jax.random.normal(k_wh, (HIDDEN, HIDDEN)),
                     dtype=np.float32) / np.sqrt(HIDDEN).astype(np.float32)
    w_o_t = np.array(jax.random.normal(k_wo, (ATOM_FDIM + HIDDEN, HIDDEN)),
                     dtype=np.float32) / np.sqrt(ATOM_FDIM + HIDDEN).astype(np.float32)
    b_o = np.array(jax.random.normal(k_bo, (HIDDEN,)), dtype=np.float32) * np.float32(0.1)
    w_o_atom = w_o_t[:ATOM_FDIM]
    w_o_msg = w_o_t[ATOM_FDIM:]

    # --- padded sizes: lane (last) axes feeding matmul K dims padded to 128 ---
    Na = _round_up(n_atoms, LANE)
    Nb = _round_up(n_bonds, LANE)
    Da = _round_up(ATOM_FDIM, LANE)
    Db = _round_up(BOND_IN_FDIM, LANE)
    Mp = _round_up(n_mols, SUB)

    f_atoms_p = np.zeros((Na, Da), np.float32); f_atoms_p[:n_atoms, :ATOM_FDIM] = f_atoms
    f_bonds_p = np.zeros((Nb, Db), np.float32); f_bonds_p[:n_bonds, :BOND_IN_FDIM] = f_bonds

    # --- exact one-hot / count matrices; fold the 3 per-step selections into one ---
    agg = np.zeros((Na, Nb), np.float32)
    for a in range(n_atoms):
        for b in a2b[a]:
            agg[a, b] += 1.0
    sel_b2a = np.zeros((Nb, Na), np.float32)
    sel_b2a[np.arange(n_bonds), b2a] = 1.0
    sel_rev = np.zeros((Nb, Nb), np.float32)
    sel_rev[np.arange(n_bonds), b2revb] = 1.0
    #   sel_b2a @ (agg @ m) - sel_rev @ m  ==  (sel_b2a @ agg - sel_rev) @ m
    m_msg = sel_b2a @ agg - sel_rev          # small integers -> exact in bf16

    scope = np.zeros((Mp, Na), np.float32)   # keep 1/a_size in f32 (not exact in bf16)
    for i, (a_start, a_size) in enumerate(a_scope):
        scope[i, a_start:a_start + a_size] = 1.0 / a_size

    # --- weights zero-padded to H_PAD=128 so every store is lane-dense ---
    w_i_p = np.zeros((Db, H_PAD), np.float32); w_i_p[:BOND_IN_FDIM, :HIDDEN] = w_i_t
    w_h_p = np.zeros((H_PAD, H_PAD), np.float32); w_h_p[:HIDDEN, :HIDDEN] = w_h_t
    w_o_atom_p = np.zeros((Da, H_PAD), np.float32); w_o_atom_p[:ATOM_FDIM, :HIDDEN] = w_o_atom
    w_o_msg_p = np.zeros((H_PAD, H_PAD), np.float32); w_o_msg_p[:HIDDEN, :HIDDEN] = w_o_msg
    b_o_p = np.zeros((1, H_PAD), np.float32); b_o_p[0, :HIDDEN] = b_o

    out = mpn_forward(
        jnp.asarray(f_bonds_p), jnp.asarray(f_atoms_p),
        jnp.asarray(m_msg, dtype=jnp.bfloat16),   # selection matrices in bf16
        jnp.asarray(agg, dtype=jnp.bfloat16),
        jnp.asarray(scope),
        jnp.asarray(w_i_p), jnp.asarray(w_h_p), jnp.asarray(w_o_atom_p),
        jnp.asarray(w_o_msg_p), jnp.asarray(b_o_p))
    out = jax.block_until_ready(out)
    mol_vecs = np.asarray(out)[:n_mols, :HIDDEN]   # (num_molecules, hidden_size)

    ref = reference_forward(f_atoms, f_bonds, a2b, b2a, b2revb, a_scope,
                            w_i_t, w_h_t, w_o_t, b_o)
    np.testing.assert_allclose(mol_vecs, ref, rtol=1e-4, atol=1e-4)
    print("KERNEL_OK")
</pallas_src>

<mosaic_0001>
module attributes {stable_mosaic.version = 11 : i64} {
  func.func @mpn_kernel(%arg0: memref<128x256xf32, #tpu.memory_space<vmem>>, %arg1: memref<128x256xf32, #tpu.memory_space<vmem>>, %arg2: memref<128x128xbf16, #tpu.memory_space<vmem>>, %arg3: memref<128x128xbf16, #tpu.memory_space<vmem>>, %arg4: memref<8x128xf32, #tpu.memory_space<vmem>>, %arg5: memref<256x128xf32, #tpu.memory_space<vmem>>, %arg6: memref<128x128xf32, #tpu.memory_space<vmem>>, %arg7: memref<256x128xf32, #tpu.memory_space<vmem>>, %arg8: memref<128x128xf32, #tpu.memory_space<vmem>>, %arg9: memref<1x128xf32, #tpu.memory_space<vmem>>, %arg10: memref<8x128xf32, #tpu.memory_space<vmem>>) attributes {dimension_semantics = [], scalar_prefetch = 0 : i64, scratch_operands = 0 : i64, tpu.core_type = #tpu.core_type<tc>} {
    %c0 = arith.constant 0 : index
    %c0_0 = arith.constant 0 : index
    %0 = vector.load %arg2[%c0, %c0_0] : memref<128x128xbf16, #tpu.memory_space<vmem>>, vector<128x128xbf16>
    %1 = arith.extf %0 : vector<128x128xbf16> to vector<128x128xf32>
    %c0_1 = arith.constant 0 : index
    %c0_2 = arith.constant 0 : index
    %2 = vector.load %arg3[%c0_1, %c0_2] : memref<128x128xbf16, #tpu.memory_space<vmem>>, vector<128x128xbf16>
    %3 = arith.extf %2 : vector<128x128xbf16> to vector<128x128xf32>
    %c0_3 = arith.constant 0 : index
    %c0_4 = arith.constant 0 : index
    %4 = vector.load %arg0[%c0_3, %c0_4] : memref<128x256xf32, #tpu.memory_space<vmem>>, vector<128x256xf32>
    %c0_5 = arith.constant 0 : index
    %c0_6 = arith.constant 0 : index
    %5 = vector.load %arg1[%c0_5, %c0_6] : memref<128x256xf32, #tpu.memory_space<vmem>>, vector<128x256xf32>
    %c0_7 = arith.constant 0 : index
    %c0_8 = arith.constant 0 : index
    %6 = vector.load %arg5[%c0_7, %c0_8] : memref<256x128xf32, #tpu.memory_space<vmem>>, vector<256x128xf32>
    %c0_9 = arith.constant 0 : index
    %c0_10 = arith.constant 0 : index
    %7 = vector.load %arg6[%c0_9, %c0_10] : memref<128x128xf32, #tpu.memory_space<vmem>>, vector<128x128xf32>
    %cst = arith.constant dense<0.000000e+00> : vector<128x128xf32>
    %8 = tpu.matmul %4, %6, %cst {dimension_numbers = #tpu.dot_dimension_numbers<[1], [0], [0], [1], [0, 0, 1, 1], [], []>} : vector<128x256xf32>, vector<256x128xf32>, vector<128x128xf32> -> vector<128x128xf32>
    %cst_11 = arith.constant 0.000000e+00 : f32
    %9 = vector.broadcast %cst_11 : f32 to vector<128x128xf32>
    %10 = arith.maximumf %8, %9 : vector<128x128xf32>
    %cst_12 = arith.constant dense<0.000000e+00> : vector<128x128xf32>
    %11 = tpu.matmul %1, %10, %cst_12 {dimension_numbers = #tpu.dot_dimension_numbers<[1], [0], [0], [1], [0, 0, 1, 1], [], []>} : vector<128x128xf32>, vector<128x128xf32>, vector<128x128xf32> -> vector<128x128xf32>
    %cst_13 = arith.constant dense<0.000000e+00> : vector<128x128xf32>
    %12 = tpu.matmul %11, %7, %cst_13 {dimension_numbers = #tpu.dot_dimension_numbers<[1], [0], [0], [1], [0, 0, 1, 1], [], []>} : vector<128x128xf32>, vector<128x128xf32>, vector<128x128xf32> -> vector<128x128xf32>
    %13 = arith.addf %8, %12 : vector<128x128xf32>
    %cst_14 = arith.constant 0.000000e+00 : f32
    %14 = vector.broadcast %cst_14 : f32 to vector<128x128xf32>
    %15 = arith.maximumf %13, %14 : vector<128x128xf32>
    %cst_15 = arith.constant dense<0.000000e+00> : vector<128x128xf32>
    %16 = tpu.matmul %1, %15, %cst_15 {dimension_numbers = #tpu.dot_dimension_numbers<[1], [0], [0], [1], [0, 0, 1, 1], [], []>} : vector<128x128xf32>, vector<128x128xf32>, vector<128x128xf32> -> vector<128x128xf32>
    %cst_16 = arith.constant dense<0.000000e+00> : vector<128x128xf32>
    %17 = tpu.matmul %16, %7, %cst_16 {dimension_numbers = #tpu.dot_dimension_numbers<[1], [0], [0], [1], [0, 0, 1, 1], [], []>} : vector<128x128xf32>, vector<128x128xf32>, vector<128x128xf32> -> vector<128x128xf32>
    %18 = arith.addf %8, %17 : vector<128x128xf32>
    %cst_17 = arith.constant 0.000000e+00 : f32
    %19 = vector.broadcast %cst_17 : f32 to vector<128x128xf32>
    %20 = arith.maximumf %18, %19 : vector<128x128xf32>
    %cst_18 = arith.constant dense<0.000000e+00> : vector<128x128xf32>
    %21 = tpu.matmul %3, %20, %cst_18 {dimension_numbers = #tpu.dot_dimension_numbers<[1], [0], [0], [1], [0, 0, 1, 1], [], []>} : vector<128x128xf32>, vector<128x128xf32>, vector<128x128xf32> -> vector<128x128xf32>
    %c0_19 = arith.constant 0 : index
    %c0_20 = arith.constant 0 : index
    %22 = vector.load %arg7[%c0_19, %c0_20] : memref<256x128xf32, #tpu.memory_space<vmem>>, vector<256x128xf32>
    %cst_21 = arith.constant dense<0.000000e+00> : vector<128x128xf32>
    %23 = tpu.matmul %5, %22, %cst_21 {dimension_numbers = #tpu.dot_dimension_numbers<[1], [0], [0], [1], [0, 0, 1, 1], [], []>} : vector<128x256xf32>, vector<256x128xf32>, vector<128x128xf32> -> vector<128x128xf32>
    %c0_22 = arith.constant 0 : index
    %c0_23 = arith.constant 0 : index
    %24 = vector.load %arg8[%c0_22, %c0_23] : memref<128x128xf32, #tpu.memory_space<vmem>>, vector<128x128xf32>
    %cst_24 = arith.constant dense<0.000000e+00> : vector<128x128xf32>
    %25 = tpu.matmul %21, %24, %cst_24 {dimension_numbers = #tpu.dot_dimension_numbers<[1], [0], [0], [1], [0, 0, 1, 1], [], []>} : vector<128x128xf32>, vector<128x128xf32>, vector<128x128xf32> -> vector<128x128xf32>
    %26 = arith.addf %23, %25 : vector<128x128xf32>
    %c0_25 = arith.constant 0 : index
    %c0_26 = arith.constant 0 : index
    %27 = vector.load %arg9[%c0_25, %c0_26] : memref<1x128xf32, #tpu.memory_space<vmem>>, vector<1x128xf32>
    %28 = vector.broadcast %27 : vector<1x128xf32> to vector<128x128xf32>
    %29 = arith.addf %26, %28 : vector<128x128xf32>
    %cst_27 = arith.constant 0.000000e+00 : f32
    %30 = vector.broadcast %cst_27 : f32 to vector<128x128xf32>
    %31 = arith.maximumf %29, %30 : vector<128x128xf32>
    %c0_28 = arith.constant 0 : index
    %c0_29 = arith.constant 0 : index
    %32 = vector.load %arg4[%c0_28, %c0_29] : memref<8x128xf32, #tpu.memory_space<vmem>>, vector<8x128xf32>
    %cst_30 = arith.constant dense<0.000000e+00> : vector<8x128xf32>
    %33 = tpu.matmul %32, %31, %cst_30 {dimension_numbers = #tpu.dot_dimension_numbers<[1], [0], [0], [1], [0, 0, 1, 1], [], []>} : vector<8x128xf32>, vector<128x128xf32>, vector<8x128xf32> -> vector<8x128xf32>
    %c0_31 = arith.constant 0 : index
    %c0_32 = arith.constant 0 : index
    %34 = vector.load %arg10[%c0_31, %c0_32] : memref<8x128xf32, #tpu.memory_space<vmem>>, vector<8x128xf32>
    tpu.vector_store %arg10[%c0_31, %c0_32], %33 {strides = array<i32>} : memref<8x128xf32, #tpu.memory_space<vmem>>, vector<8x128xf32>,
    return
  }
}

</mosaic_0001>

<llo_original>
// kernel: tpu_custom_call.1
$region0: #{tpu_custom_call.1}
  #allocation0 [shape = 'u32[]', space=smem, size = 0x4, offset = 0x4, fixed_abs, tag = 'smem constant byte address 0x4 - core index']
  #allocation1 [shape = 'u32[144,128]{1,0:T(1,128)}', space=vmem, size = 0x12000, scoped, tag = 'internal scratch']
  %s0 = inlined_call_operand.hbm [shape: f32[128,256], index: 0, kind: input, shape index: {}]
  %s1 = inlined_call_operand.hbm [shape: f32[128,256], index: 1, kind: input, shape index: {}]
  %s2 = inlined_call_operand.hbm [shape: bf16[128,128], index: 2, kind: input, shape index: {}]
  %s3 = inlined_call_operand.hbm [shape: bf16[128,128], index: 3, kind: input, shape index: {}]
  %s4 = inlined_call_operand.hbm [shape: f32[8,128], index: 4, kind: input, shape index: {}]
  %s5 = inlined_call_operand.hbm [shape: f32[256,128], index: 5, kind: input, shape index: {}]
  %s6 = inlined_call_operand.hbm [shape: f32[128,128], index: 6, kind: input, shape index: {}]
  %s7 = inlined_call_operand.hbm [shape: f32[256,128], index: 7, kind: input, shape index: {}]
  %s8 = inlined_call_operand.hbm [shape: f32[128,128], index: 8, kind: input, shape index: {}]
  %s9 = inlined_call_operand.vmem [shape: f32[1,128], index: 9, kind: input, shape index: {}]
  %s10 = inlined_call_operand.hbm [shape: f32[8,128], index: 10, kind: output, shape index: {}]
  %s11 = sld [smem:[#allocation0]]
  $region86: #{tpu_custom_call.1} parent=0
    _
  %s13 = ssub.s32 1, %s11
  %s14 = scalar_select 0, %s13, %s11
  $region1: #{tpu_custom_call.1} parent=0
    #allocation2 [shape = 'u8[131072]{0}', space=vmem, size = 0x20000, scoped, tag = 'input window, operand 0, single buffered']
    #allocation3 [shape = 's32[1]{0}', space=sflag, size = 0x4, scoped, tag = 'scoped memory for tpu_custom_call.1']
    #allocation4 [shape = 's32[1]{0}', space=sflag, size = 0x4, scoped, tag = 'scoped memory for tpu_custom_call.1']
    #allocation5 [shape = 'u8[131072]{0}', space=vmem, size = 0x20000, scoped, tag = 'input window, operand 1, single buffered']
    #allocation6 [shape = 's32[1]{0}', space=sflag, size = 0x4, scoped, tag = 'scoped memory for tpu_custom_call.1']
    #allocation7 [shape = 'u8[32768]{0}', space=vmem, size = 0x8000, scoped, tag = 'input window, operand 2, single buffered']
    #allocation8 [shape = 'u8[32768]{0}', space=vmem, size = 0x8000, scoped, tag = 'input window, operand 3, single buffered']
    #allocation9 [shape = 's32[1]{0}', space=sflag, size = 0x4, scoped, tag = 'scoped memory for tpu_custom_call.1']
    #allocation10 [shape = 'u8[4096]{0}', space=vmem, size = 0x1000, scoped, tag = 'input window, operand 4, single buffered']
    #allocation11 [shape = 'u8[131072]{0}', space=vmem, size = 0x20000, scoped, tag = 'input window, operand 5, single buffered']
    #allocation12 [shape = 's32[1]{0}', space=sflag, size = 0x4, scoped, tag = 'scoped memory for tpu_custom_call.1']
    #allocation13 [shape = 'u8[65536]{0}', space=vmem, size = 0x10000, scoped, tag = 'input window, operand 6, single buffered']
    #allocation14 [shape = 'u8[131072]{0}', space=vmem, size = 0x20000, scoped, tag = 'input window, operand 7, single buffered']
    #allocation15 [shape = 's32[1]{0}', space=sflag, size = 0x4, scoped, tag = 'scoped memory for tpu_custom_call.1']
    #allocation16 [shape = 'u8[65536]{0}', space=vmem, size = 0x10000, scoped, tag = 'input window, operand 8, single buffered']
    #allocation17 [shape = 'u8[4096]{0}', space=vmem, size = 0x1000, scoped, tag = 'output window, operand 0, single buffered']
    %15 = vsyncpa [#allocation3], 0
    %16 = vsyncpa [#allocation6], 0
    %17 = vsyncpa [#allocation9], 0
    %18 = vsyncpa [#allocation12], 0
    %19 = vsyncpa [#allocation15], 0
    %20 = vsyncpa [#allocation4], 0
    // Predicated region
    $region2: #{tpu_custom_call.1} parent=1 // pred_check
      _
    $region3: #{tpu_custom_call.1} parent=1 // pred_check_branch
      %22 = sbr.rel (0) target = $region5
    $region4: #{tpu_custom_call.1} parent=1 // pred_region
      %s24 = ssub.s32 4096, 4096
      %25 = vsyncadd [#allocation3], %s24
      %s26 = sshll.u32 [#allocation2], 4
      %s27 = int_to_ptr.vmem [resolvable:$true] %s26
      %32 = dma.hbm_to_vmem [thread:$0]  %s0, 4096, %s27, [#allocation3], 256, 256, 16
    $region5: #{tpu_custom_call.1} parent=1 // pred_fallthru
      _
    // Predicated region
    $region6: #{tpu_custom_call.1} parent=1 // pred_check
      _
    $region7: #{tpu_custom_call.1} parent=1 // pred_check_branch
      %34 = sbr.rel (0) target = $region9
    $region8: #{tpu_custom_call.1} parent=1 // pred_region
      %s36 = ssub.s32 4096, 4096
      %37 = vsyncadd [#allocation6], %s36
      %s38 = sshll.u32 [#allocation5], 4
      %s39 = int_to_ptr.vmem [resolvable:$true] %s38
      %44 = dma.hbm_to_vmem [thread:$0]  %s1, 4096, %s39, [#allocation6], 256, 256, 16
    $region9: #{tpu_custom_call.1} parent=1 // pred_fallthru
      _
    // Predicated region
    $region10: #{tpu_custom_call.1} parent=1 // pred_check
      _
    $region11: #{tpu_custom_call.1} parent=1 // pred_check_branch
      %46 = sbr.rel (0) target = $region13
    $region12: #{tpu_custom_call.1} parent=1 // pred_region
      %s48 = ssub.s32 1024, 1024
      %49 = vsyncadd [#allocation6], %s48
      %s50 = sshll.u32 [#allocation7], 4
      %s51 = int_to_ptr.vmem [resolvable:$true] %s50
      %56 = dma.hbm_to_vmem [thread:$0]  %s2, 1024, %s51, [#allocation6], 64, 64, 4
    $region13: #{tpu_custom_call.1} parent=1 // pred_fallthru
      _
    // Predicated region
    $region14: #{tpu_custom_call.1} parent=1 // pred_check
      _
    $region15: #{tpu_custom_call.1} parent=1 // pred_check_branch
      %58 = sbr.rel (0) target = $region17
    $region16: #{tpu_custom_call.1} parent=1 // pred_region
      %s60 = ssub.s32 1024, 1024
      %61 = vsyncadd [#allocation9], %s60
      %s62 = sshll.u32 [#allocation8], 4
      %s63 = int_to_ptr.vmem [resolvable:$true] %s62
      %68 = dma.hbm_to_vmem [thread:$0]  %s3, 1024, %s63, [#allocation9], 64, 64, 4
    $region17: #{tpu_custom_call.1} parent=1 // pred_fallthru
      _
    // Predicated region
    $region18: #{tpu_custom_call.1} parent=1 // pred_check
      _
    $region19: #{tpu_custom_call.1} parent=1 // pred_check_branch
      %70 = sbr.rel (0) target = $region21
    $region20: #{tpu_custom_call.1} parent=1 // pred_region
      %s72 = ssub.s32 128, 128
      %73 = vsyncadd [#allocation9], %s72
      %s75 = sshll.u32 [#allocation10], 4
      %s76 = int_to_ptr.vmem [resolvable:$true] %s75
      %78 = dma.hbm_to_vmem [thread:$0]  %s4, 128, %s76, [#allocation9]
    $region21: #{tpu_custom_call.1} parent=1 // pred_fallthru
      _
    // Predicated region
    $region22: #{tpu_custom_call.1} parent=1 // pred_check
      _
    $region23: #{tpu_custom_call.1} parent=1 // pred_check_branch
      %80 = sbr.rel (0) target = $region25
    $region24: #{tpu_custom_call.1} parent=1 // pred_region
      %s82 = ssub.s32 4096, 4096
      %83 = vsyncadd [#allocation12], %s82
      %s84 = sshll.u32 [#allocation11], 4
      %s85 = int_to_ptr.vmem [resolvable:$true] %s84
      %90 = dma.hbm_to_vmem [thread:$0]  %s5, 4096, %s85, [#allocation12], 128, 128, 8
    $region25: #{tpu_custom_call.1} parent=1 // pred_fallthru
      _
    // Predicated region
    $region26: #{tpu_custom_call.1} parent=1 // pred_check
      _
    $region27: #{tpu_custom_call.1} parent=1 // pred_check_branch
      %92 = sbr.rel (0) target = $region29
    $region28: #{tpu_custom_call.1} parent=1 // pred_region
      %s94 = ssub.s32 2048, 2048
      %95 = vsyncadd [#allocation12], %s94
      %s96 = sshll.u32 [#allocation13], 4
      %s97 = int_to_ptr.vmem [resolvable:$true] %s96
      %102 = dma.hbm_to_vmem [thread:$0]  %s6, 2048, %s97, [#allocation12], 128, 128, 8
    $region29: #{tpu_custom_call.1} parent=1 // pred_fallthru
      _
    // Predicated region
    $region30: #{tpu_custom_call.1} parent=1 // pred_check
      _
    $region31: #{tpu_custom_call.1} parent=1 // pred_check_branch
      %104 = sbr.rel (0) target = $region33
    $region32: #{tpu_custom_call.1} parent=1 // pred_region
      %s106 = ssub.s32 4096, 4096
      %107 = vsyncadd [#allocation15], %s106
      %s108 = sshll.u32 [#allocation14], 4
      %s109 = int_to_ptr.vmem [resolvable:$true] %s108
      %114 = dma.hbm_to_vmem [thread:$0]  %s7, 4096, %s109, [#allocation15], 128, 128, 8
    $region33: #{tpu_custom_call.1} parent=1 // pred_fallthru
      _
    // Predicated region
    $region34: #{tpu_custom_call.1} parent=1 // pred_check
      _
    $region35: #{tpu_custom_call.1} parent=1 // pred_check_branch
      %116 = sbr.rel (0) target = $region37
    $region36: #{tpu_custom_call.1} parent=1 // pred_region
      %s118 = ssub.s32 2048, 2048
      %119 = vsyncadd [#allocation15], %s118
      %s120 = sshll.u32 [#allocation16], 4
      %s121 = int_to_ptr.vmem [resolvable:$true] %s120
      %126 = dma.hbm_to_vmem [thread:$0]  %s8, 2048, %s121, [#allocation15], 128, 128, 8
    $region37: #{tpu_custom_call.1} parent=1 // pred_fallthru
      _
    // Predicated region
    $region38: #{tpu_custom_call.1} parent=1 // pred_check
      _
    $region39: #{tpu_custom_call.1} parent=1 // pred_check_branch
      %128 = sbr.rel (0) target = $region41
    $region40: #{tpu_custom_call.1} parent=1 // pred_region
      _
    $region41: #{tpu_custom_call.1} parent=1 // pred_fallthru
      _
    // Predicated region
    $region42: #{tpu_custom_call.1} parent=1 // pred_check
      _
    $region43: #{tpu_custom_call.1} parent=1 // pred_check_branch
      %130 = sbr.rel (0) target = $region45
    $region44: #{tpu_custom_call.1} parent=1 // pred_region
      %131 = dma.done [#allocation3], 4096
    $region45: #{tpu_custom_call.1} parent=1 // pred_fallthru
      _
    // Predicated region
    $region46: #{tpu_custom_call.1} parent=1 // pred_check
      _
    $region47: #{tpu_custom_call.1} parent=1 // pred_check_branch
      %133 = sbr.rel (0) target = $region49
    $region48: #{tpu_custom_call.1} parent=1 // pred_region
      %134 = dma.done [#allocation6], 4096
    $region49: #{tpu_custom_call.1} parent=1 // pred_fallthru
      _
    // Predicated region
    $region50: #{tpu_custom_call.1} parent=1 // pred_check
      _
    $region51: #{tpu_custom_call.1} parent=1 // pred_check_branch
      %136 = sbr.rel (0) target = $region53
    $region52: #{tpu_custom_call.1} parent=1 // pred_region
      %137 = dma.done [#allocation6], 1024
    $region53: #{tpu_custom_call.1} parent=1 // pred_fallthru
      _
    // Predicated region
    $region54: #{tpu_custom_call.1} parent=1 // pred_check
      _
    $region55: #{tpu_custom_call.1} parent=1 // pred_check_branch
      %139 = sbr.rel (0) target = $region57
    $region56: #{tpu_custom_call.1} parent=1 // pred_region
      %140 = dma.done [#allocation9], 1024
    $region57: #{tpu_custom_call.1} parent=1 // pred_fallthru
      _
    // Predicated region
    $region58: #{tpu_custom_call.1} parent=1 // pred_check
      _
    $region59: #{tpu_custom_call.1} parent=1 // pred_check_branch
      %142 = sbr.rel (0) target = $region61
    $region60: #{tpu_custom_call.1} parent=1 // pred_region
      %143 = dma.done [#allocation9], 128
    $region61: #{tpu_custom_call.1} parent=1 // pred_fallthru
      _
    // Predicated region
    $region62: #{tpu_custom_call.1} parent=1 // pred_check
      _
    $region63: #{tpu_custom_call.1} parent=1 // pred_check_branch
      %145 = sbr.rel (0) target = $region65
    $region64: #{tpu_custom_call.1} parent=1 // pred_region
      %146 = dma.done [#allocation12], 4096
    $region65: #{tpu_custom_call.1} parent=1 // pred_fallthru
      _
    // Predicated region
    $region66: #{tpu_custom_call.1} parent=1 // pred_check
      _
    $region67: #{tpu_custom_call.1} parent=1 // pred_check_branch
      %148 = sbr.rel (0) target = $region69
    $region68: #{tpu_custom_call.1} parent=1 // pred_region
      %149 = dma.done [#allocation12], 2048
    $region69: #{tpu_custom_call.1} parent=1 // pred_fallthru
      _
    // Predicated region
    $region70: #{tpu_custom_call.1} parent=1 // pred_check
      _
    $region71: #{tpu_custom_call.1} parent=1 // pred_check_branch
      %151 = sbr.rel (0) target = $region73
    $region72: #{tpu_custom_call.1} parent=1 // pred_region
      %152 = dma.done [#allocation15], 4096
    $region73: #{tpu_custom_call.1} parent=1 // pred_fallthru
      _
    // Predicated region
    $region74: #{tpu_custom_call.1} parent=1 // pred_check
      _
    $region75: #{tpu_custom_call.1} parent=1 // pred_check_branch
      %154 = sbr.rel (0) target = $region77
    $region76: #{tpu_custom_call.1} parent=1 // pred_region
      %155 = dma.done [#allocation15], 2048
    $region77: #{tpu_custom_call.1} parent=1 // pred_fallthru
      _
    %v156 = vld [vmem:[#allocation7] sm:$0xf]
    %v157 = vld [vmem:[#allocation7 + $0x4] sm:$0xf]
    %v158 = vld [vmem:[#allocation7 + $0x8] sm:$0xf]
    %v159 = vld [vmem:[#allocation7 + $0xc] sm:$0xf]
    %v160 = vld [vmem:[#allocation7 + $0x10] sm:$0xf]
    %v161 = vld [vmem:[#allocation7 + $0x14] sm:$0xf]
    %v162 = vld [vmem:[#allocation7 + $0x18] sm:$0xf]
    %v163 = vld [vmem:[#allocation7 + $0x1c] sm:$0xf]
    %v164 = vld [vmem:[#allocation7 + $0x20] sm:$0xf]
    %v165 = vld [vmem:[#allocation7 + $0x24] sm:$0xf]
    %v166 = vld [vmem:[#allocation7 + $0x28] sm:$0xf]
    %v167 = vld [vmem:[#allocation7 + $0x2c] sm:$0xf]
    %v168 = vld [vmem:[#allocation7 + $0x30] sm:$0xf]
    %v169 = vld [vmem:[#allocation7 + $0x34] sm:$0xf]
    %v170 = vld [vmem:[#allocation7 + $0x38] sm:$0xf]
    %v171 = vld [vmem:[#allocation7 + $0x3c] sm:$0xf]
    %v172 = vunpack.c.l.bf16 %v156
    %v173 = vunpack.c.l.bf16 %v157
    %v174 = vunpack.c.l.bf16 %v158
    %v175 = vunpack.c.l.bf16 %v159
    %v176 = vunpack.c.l.bf16 %v160
    %v177 = vunpack.c.l.bf16 %v161
    %v178 = vunpack.c.l.bf16 %v162
    %v179 = vunpack.c.l.bf16 %v163
    %v180 = vunpack.c.l.bf16 %v164
    %v181 = vunpack.c.l.bf16 %v165
    %v182 = vunpack.c.l.bf16 %v166
    %v183 = vunpack.c.l.bf16 %v167
    %v184 = vunpack.c.l.bf16 %v168
    %v185 = vunpack.c.l.bf16 %v169
    %v186 = vunpack.c.l.bf16 %v170
    %v187 = vunpack.c.l.bf16 %v171
    %v188 = vld [vmem:[#allocation8] sm:$0xf]
    %v189 = vld [vmem:[#allocation8 + $0x4] sm:$0xf]
    %v190 = vld [vmem:[#allocation8 + $0x8] sm:$0xf]
    %v191 = vld [vmem:[#allocation8 + $0xc] sm:$0xf]
    %v192 = vld [vmem:[#allocation8 + $0x10] sm:$0xf]
    %v193 = vld [vmem:[#allocation8 + $0x14] sm:$0xf]
    %v194 = vld [vmem:[#allocation8 + $0x18] sm:$0xf]
    %v195 = vld [vmem:[#allocation8 + $0x1c] sm:$0xf]
    %v196 = vld [vmem:[#allocation8 + $0x20] sm:$0xf]
    %v197 = vld [vmem:[#allocation8 + $0x24] sm:$0xf]
    %v198 = vld [vmem:[#allocation8 + $0x28] sm:$0xf]
    %v199 = vld [vmem:[#allocation8 + $0x2c] sm:$0xf]
    %v200 = vld [vmem:[#allocation8 + $0x30] sm:$0xf]
    %v201 = vld [vmem:[#allocation8 + $0x34] sm:$0xf]
    %v202 = vld [vmem:[#allocation8 + $0x38] sm:$0xf]
    %v203 = vld [vmem:[#allocation8 + $0x3c] sm:$0xf]
    %v204 = vunpack.c.l.bf16 %v188
    %v205 = vunpack.c.l.bf16 %v189
    %v206 = vunpack.c.l.bf16 %v190
    %v207 = vunpack.c.l.bf16 %v191
    %v208 = vunpack.c.l.bf16 %v192
    %v209 = vunpack.c.l.bf16 %v193
    %v210 = vunpack.c.l.bf16 %v194
    %v211 = vunpack.c.l.bf16 %v195
    %v212 = vunpack.c.l.bf16 %v196
    %v213 = vunpack.c.l.bf16 %v197
    %v214 = vunpack.c.l.bf16 %v198
    %v215 = vunpack.c.l.bf16 %v199
    %v216 = vunpack.c.l.bf16 %v200
    %v217 = vunpack.c.l.bf16 %v201
    %v218 = vunpack.c.l.bf16 %v202
    %v219 = vunpack.c.l.bf16 %v203
    %v220 = vld [vmem:[#allocation2] sm:$0xff]
    %v221 = vld [vmem:[#allocation2 + $0x8] sm:$0xff]
    %v222 = vld [vmem:[#allocation2 + $0x10] sm:$0xff]
    %v223 = vld [vmem:[#allocation2 + $0x18] sm:$0xff]
    %v224 = vld [vmem:[#allocation2 + $0x20] sm:$0xff]
    %v225 = vld [vmem:[#allocation2 + $0x28] sm:$0xff]
    %v226 = vld [vmem:[#allocation2 + $0x30] sm:$0xff]
    %v227 = vld [vmem:[#allocation2 + $0x38] sm:$0xff]
    %v228 = vld [vmem:[#allocation2 + $0x40] sm:$0xff]
    %v229 = vld [vmem:[#allocation2 + $0x48] sm:$0xff]
    %v230 = vld [vmem:[#allocation2 + $0x50] sm:$0xff]
    %v231 = vld [vmem:[#allocation2 + $0x58] sm:$0xff]
    %v232 = vld [vmem:[#allocation2 + $0x60] sm:$0xff]
    %v233 = vld [vmem:[#allocation2 + $0x68] sm:$0xff]
    %v234 = vld [vmem:[#allocation2 + $0x70] sm:$0xff]
    %v235 = vld [vmem:[#allocation2 + $0x78] sm:$0xff]
    %v236 = vld [vmem:[#allocation2 + $0x80] sm:$0xff]
    %v237 = vld [vmem:[#allocation2 + $0x88] sm:$0xff]
    %v238 = vld [vmem:[#allocation2 + $0x90] sm:$0xff]
    %v239 = vld [vmem:[#allocation2 + $0x98] sm:$0xff]
    %v240 = vld [vmem:[#allocation2 + $0xa0] sm:$0xff]
    %v241 = vld [vmem:[#allocation2 + $0xa8] sm:$0xff]
    %v242 = vld [vmem:[#allocation2 + $0xb0] sm:$0xff]
    %v243 = vld [vmem:[#allocation2 + $0xb8] sm:$0xff]
    %v244 = vld [vmem:[#allocation2 + $0xc0] sm:$0xff]
    %v245 = vld [vmem:[#allocation2 + $0xc8] sm:$0xff]
    %v246 = vld [vmem:[#allocation2 + $0xd0] sm:$0xff]
    %v247 = vld [vmem:[#allocation2 + $0xd8] sm:$0xff]
    %v248 = vld [vmem:[#allocation2 + $0xe0] sm:$0xff]
    %v249 = vld [vmem:[#allocation2 + $0xe8] sm:$0xff]
    %v250 = vld [vmem:[#allocation2 + $0xf0] sm:$0xff]
    %v251 = vld [vmem:[#allocation2 + $0xf8] sm:$0xff]
    %v252 = vld [vmem:[#allocation5] sm:$0xff]
    %v253 = vld [vmem:[#allocation5 + $0x8] sm:$0xff]
    %v254 = vld [vmem:[#allocation5 + $0x10] sm:$0xff]
    %v255 = vld [vmem:[#allocation5 + $0x18] sm:$0xff]
    %v256 = vld [vmem:[#allocation5 + $0x20] sm:$0xff]
    %v257 = vld [vmem:[#allocation5 + $0x28] sm:$0xff]
    %v258 = vld [vmem:[#allocation5 + $0x30] sm:$0xff]
    %v259 = vld [vmem:[#allocation5 + $0x38] sm:$0xff]
    %v260 = vld [vmem:[#allocation5 + $0x40] sm:$0xff]
    %v261 = vld [vmem:[#allocation5 + $0x48] sm:$0xff]
    %v262 = vld [vmem:[#allocation5 + $0x50] sm:$0xff]
    %v263 = vld [vmem:[#allocation5 + $0x58] sm:$0xff]
    %v264 = vld [vmem:[#allocation5 + $0x60] sm:$0xff]
    %v265 = vld [vmem:[#allocation5 + $0x68] sm:$0xff]
    %v266 = vld [vmem:[#allocation5 + $0x70] sm:$0xff]
    %v267 = vld [vmem:[#allocation5 + $0x78] sm:$0xff]
    %v268 = vld [vmem:[#allocation5 + $0x80] sm:$0xff]
    %v269 = vld [vmem:[#allocation5 + $0x88] sm:$0xff]
    %v270 = vld [vmem:[#allocation5 + $0x90] sm:$0xff]
    %v271 = vld [vmem:[#allocation5 + $0x98] sm:$0xff]
    %v272 = vld [vmem:[#allocation5 + $0xa0] sm:$0xff]
    %v273 = vld [vmem:[#allocation5 + $0xa8] sm:$0xff]
    %v274 = vld [vmem:[#allocation5 + $0xb0] sm:$0xff]
    %v275 = vld [vmem:[#allocation5 + $0xb8] sm:$0xff]
    %v276 = vld [vmem:[#allocation5 + $0xc0] sm:$0xff]
    %v277 = vld [vmem:[#allocation5 + $0xc8] sm:$0xff]
    %v278 = vld [vmem:[#allocation5 + $0xd0] sm:$0xff]
    %v279 = vld [vmem:[#allocation5 + $0xd8] sm:$0xff]
    %v280 = vld [vmem:[#allocation5 + $0xe0] sm:$0xff]
    %v281 = vld [vmem:[#allocation5 + $0xe8] sm:$0xff]
    %v282 = vld [vmem:[#allocation5 + $0xf0] sm:$0xff]
    %v283 = vld [vmem:[#allocation5 + $0xf8] sm:$0xff]
    %v284 = vld [vmem:[#allocation11] sm:$0xff]
    %v285 = vld [vmem:[#allocation11 + $0x8] sm:$0xff]
    %v286 = vld [vmem:[#allocation11 + $0x10] sm:$0xff]
    %v287 = vld [vmem:[#allocation11 + $0x18] sm:$0xff]
    %v288 = vld [vmem:[#allocation11 + $0x20] sm:$0xff]
    %v289 = vld [vmem:[#allocation11 + $0x28] sm:$0xff]
    %v290 = vld [vmem:[#allocation11 + $0x30] sm:$0xff]
    %v291 = vld [vmem:[#allocation11 + $0x38] sm:$0xff]
    %v292 = vld [vmem:[#allocation11 + $0x40] sm:$0xff]
    %v293 = vld [vmem:[#allocation11 + $0x48] sm:$0xff]
    %v294 = vld [vmem:[#allocation11 + $0x50] sm:$0xff]
    %v295 = vld [vmem:[#allocation11 + $0x58] sm:$0xff]
    %v296 = vld [vmem:[#allocation11 + $0x60] sm:$0xff]
    %v297 = vld [vmem:[#allocation11 + $0x68] sm:$0xff]
    %v298 = vld [vmem:[#allocation11 + $0x70] sm:$0xff]
    %v299 = vld [vmem:[#allocation11 + $0x78] sm:$0xff]
    %v300 = vld [vmem:[#allocation11 + $0x80] sm:$0xff]
    %v301 = vld [vmem:[#allocation11 + $0x88] sm:$0xff]
    %v302 = vld [vmem:[#allocation11 + $0x90] sm:$0xff]
    %v303 = vld [vmem:[#allocation11 + $0x98] sm:$0xff]
    %v304 = vld [vmem:[#allocation11 + $0xa0] sm:$0xff]
    %v305 = vld [vmem:[#allocation11 + $0xa8] sm:$0xff]
    %v306 = vld [vmem:[#allocation11 + $0xb0] sm:$0xff]
    %v307 = vld [vmem:[#allocation11 + $0xb8] sm:$0xff]
    %v308 = vld [vmem:[#allocation11 + $0xc0] sm:$0xff]
    %v309 = vld [vmem:[#allocation11 + $0xc8] sm:$0xff]
    %v310 = vld [vmem:[#allocation11 + $0xd0] sm:$0xff]
    %v311 = vld [vmem:[#allocation11 + $0xd8] sm:$0xff]
    %v312 = vld [vmem:[#allocation11 + $0xe0] sm:$0xff]
    %v313 = vld [vmem:[#allocation11 + $0xe8] sm:$0xff]
    %v314 = vld [vmem:[#allocation11 + $0xf0] sm:$0xff]
    %v315 = vld [vmem:[#allocation11 + $0xf8] sm:$0xff]
    %v316 = vld [vmem:[#allocation13] sm:$0xff]
    %v317 = vld [vmem:[#allocation13 + $0x8] sm:$0xff]
    %v318 = vld [vmem:[#allocation13 + $0x10] sm:$0xff]
    %v319 = vld [vmem:[#allocation13 + $0x18] sm:$0xff]
    %v320 = vld [vmem:[#allocation13 + $0x20] sm:$0xff]
    %v321 = vld [vmem:[#allocation13 + $0x28] sm:$0xff]
    %v322 = vld [vmem:[#allocation13 + $0x30] sm:$0xff]
    %v323 = vld [vmem:[#allocation13 + $0x38] sm:$0xff]
    %v324 = vld [vmem:[#allocation13 + $0x40] sm:$0xff]
    %v325 = vld [vmem:[#allocation13 + $0x48] sm:$0xff]
    %v326 = vld [vmem:[#allocation13 + $0x50] sm:$0xff]
    %v327 = vld [vmem:[#allocation13 + $0x58] sm:$0xff]
    %v328 = vld [vmem:[#allocation13 + $0x60] sm:$0xff]
    %v329 = vld [vmem:[#allocation13 + $0x68] sm:$0xff]
    %v330 = vld [vmem:[#allocation13 + $0x70] sm:$0xff]
    %v331 = vld [vmem:[#allocation13 + $0x78] sm:$0xff]
    %332 = vmatprep.subr.mxu0 0.0
    %333 = vmatpush1.msra.mxu0 %v299
    %334 = vmatprep.subr.mxu0 0.0
    %335 = vmatpush1.msra.mxu0 %v298
    %336 = vmatprep.subr.mxu0 0.0
    %337 = vmatpush1.msra.mxu0 %v297
    %338 = vmatprep.subr.mxu0 0.0
    %339 = vmatpush1.msra.mxu0 %v296
    %340 = vmatprep.subr.mxu0 0.0
    %341 = vmatpush1.msra.mxu0 %v295
    %342 = vmatprep.subr.mxu0 0.0
    %343 = vmatpush1.msra.mxu0 %v294
    %344 = vmatprep.subr.mxu0 0.0
    %345 = vmatpush1.msra.mxu0 %v293
    %346 = vmatprep.subr.mxu0 0.0
    %347 = vmatpush1.msra.mxu0 %v292
    %348 = vmatprep.subr.mxu0 0.0
    %349 = vmatpush1.msra.mxu0 %v291
    %350 = vmatprep.subr.mxu0 0.0
    %351 = vmatpush1.msra.mxu0 %v290
    %352 = vmatprep.subr.mxu0 0.0
    %353 = vmatpush1.msra.mxu0 %v289
    %354 = vmatprep.subr.mxu0 0.0
    %355 = vmatpush1.msra.mxu0 %v288
    %356 = vmatprep.subr.mxu0 0.0
    %357 = vmatpush1.msra.mxu0 %v287
    %358 = vmatprep.subr.mxu0 0.0
    %359 = vmatpush1.msra.mxu0 %v286
    %360 = vmatprep.subr.mxu0 0.0
    %361 = vmatpush1.msra.mxu0 %v285
    %362 = vmatprep.subr.mxu0 0.0
    %363 = vmatpush1.msra.mxu0 %v284
    %364 = vmatprep.subr.mxu0 0.0
    %365 = vmatpush2.msra.mxu0 %v315
    %366 = vmatprep.subr.mxu0 0.0
    %367 = vmatpush2.msra.mxu0 %v314
    %368 = vmatprep.subr.mxu0 0.0
    %369 = vmatpush2.msra.mxu0 %v313
    %370 = vmatprep.subr.mxu0 0.0
    %371 = vmatpush2.msra.mxu0 %v312
    %372 = vmatprep.subr.mxu0 0.0
    %373 = vmatpush2.msra.mxu0 %v311
    %374 = vmatprep.subr.mxu0 0.0
    %375 = vmatpush2.msra.mxu0 %v310
    %376 = vmatprep.subr.mxu0 0.0
    %377 = vmatpush2.msra.mxu0 %v309
    %378 = vmatprep.subr.mxu0 0.0
    %379 = vmatpush2.msra.mxu0 %v308
    %380 = vmatprep.subr.mxu0 0.0
    %381 = vmatpush2.msra.mxu0 %v307
    %382 = vmatprep.subr.mxu0 0.0
    %383 = vmatpush2.msra.mxu0 %v306
    %384 = vmatprep.subr.mxu0 0.0
    %385 = vmatpush2.msra.mxu0 %v305
    %386 = vmatprep.subr.mxu0 0.0
    %387 = vmatpush2.msra.mxu0 %v304
    %388 = vmatprep.subr.mxu0 0.0
    %389 = vmatpush2.msra.mxu0 %v303
    %390 = vmatprep.subr.mxu0 0.0
    %391 = vmatpush2.msra.mxu0 %v302
    %392 = vmatprep.subr.mxu0 0.0
    %393 = vmatpush2.msra.mxu0 %v301
    %394 = vmatprep.subr.mxu0 0.0
    %395 = vmatpush2.msra.mxu0 %v300
    %396 = vmatprep.mubr.f32.mxu0 %v221
    %397 = vmatmul.mubr.f32.gmra.mxu0 %v220
    %v398 = vpop.f32.mrf.mxu0
    %v399 = vadd.f32 0.0, %v398
    %v400 = vpop.f32.mrf.mxu0
    %401 = vmatprep.mubr.f32.mxu0 %v223
    %402 = vmatmul.mubr.f32.gmra.mxu0 %v222
    %v403 = vpop.f32.mrf.mxu0
    %v404 = vadd.f32 0.0, %v403
    %v405 = vpop.f32.mrf.mxu0
    %406 = vmatprep.mubr.f32.mxu0 %v225
    %407 = vmatmul.mubr.f32.gmra.mxu0 %v224
    %v408 = vpop.f32.mrf.mxu0
    %v409 = vadd.f32 0.0, %v408
    %v410 = vpop.f32.mrf.mxu0
    %411 = vmatprep.mubr.f32.mxu0 %v227
    %412 = vmatmul.mubr.f32.gmra.mxu0 %v226
    %v413 = vpop.f32.mrf.mxu0
    %v414 = vadd.f32 0.0, %v413
    %v415 = vpop.f32.mrf.mxu0
    %416 = vmatprep.mubr.f32.mxu0 %v229
    %417 = vmatmul.mubr.f32.gmra.mxu0 %v228
    %v418 = vpop.f32.mrf.mxu0
    %v419 = vadd.f32 0.0, %v418
    %v420 = vpop.f32.mrf.mxu0
    %421 = vmatprep.mubr.f32.mxu0 %v231
    %422 = vmatmul.mubr.f32.gmra.mxu0 %v230
    %v423 = vpop.f32.mrf.mxu0
    %v424 = vadd.f32 0.0, %v423
    %v425 = vpop.f32.mrf.mxu0
    %426 = vmatprep.mubr.f32.mxu0 %v233
    %427 = vmatmul.mubr.f32.gmra.mxu0 %v232
    %v428 = vpop.f32.mrf.mxu0
    %v429 = vadd.f32 0.0, %v428
    %v430 = vpop.f32.mrf.mxu0
    %431 = vmatprep.mubr.f32.mxu0 %v235
    %432 = vmatmul.mubr.f32.gmra.mxu0 %v234
    %v433 = vpop.f32.mrf.mxu0
    %v434 = vadd.f32 0.0, %v433
    %v435 = vpop.f32.mrf.mxu0
    %436 = vmatprep.mubr.f32.mxu0 %v237
    %437 = vmatmul.mubr.f32.gmra.mxu0 %v236
    %v438 = vpop.f32.mrf.mxu0
    %v439 = vadd.f32 0.0, %v438
    %v440 = vpop.f32.mrf.mxu0
    %441 = vmatprep.mubr.f32.mxu0 %v239
    %442 = vmatmul.mubr.f32.gmra.mxu0 %v238
    %v443 = vpop.f32.mrf.mxu0
    %v444 = vadd.f32 0.0, %v443
    %v445 = vpop.f32.mrf.mxu0
    %446 = vmatprep.mubr.f32.mxu0 %v241
    %447 = vmatmul.mubr.f32.gmra.mxu0 %v240
    %v448 = vpop.f32.mrf.mxu0
    %v449 = vadd.f32 0.0, %v448
    %v450 = vpop.f32.mrf.mxu0
    %451 = vmatprep.mubr.f32.mxu0 %v243
    %452 = vmatmul.mubr.f32.gmra.mxu0 %v242
    %v453 = vpop.f32.mrf.mxu0
    %v454 = vadd.f32 0.0, %v453
    %v455 = vpop.f32.mrf.mxu0
    %456 = vmatprep.mubr.f32.mxu0 %v245
    %457 = vmatmul.mubr.f32.gmra.mxu0 %v244
    %v458 = vpop.f32.mrf.mxu0
    %v459 = vadd.f32 0.0, %v458
    %v460 = vpop.f32.mrf.mxu0
    %461 = vmatprep.mubr.f32.mxu0 %v247
    %462 = vmatmul.mubr.f32.gmra.mxu0 %v246
    %v463 = vpop.f32.mrf.mxu0
    %v464 = vadd.f32 0.0, %v463
    %v465 = vpop.f32.mrf.mxu0
    %466 = vmatprep.mubr.f32.mxu0 %v249
    %467 = vmatmul.mubr.f32.gmra.mxu0 %v248
    %v468 = vpop.f32.mrf.mxu0
    %v469 = vadd.f32 0.0, %v468
    %v470 = vpop.f32.mrf.mxu0
    %471 = vmatprep.mubr.f32.mxu0 %v251
    %472 = vmatmul.mubr.f32.gmra.mxu0 %v250
    %v473 = vpop.f32.mrf.mxu0
    %v474 = vadd.f32 0.0, %v473
    %v475 = vpop.f32.mrf.mxu0
    %476 = vdwg.mxu0
    %v477 = vmax.f32 %v399, 0.0
    %v478 = vmax.f32 %v404, 0.0
    %v479 = vmax.f32 %v409, 0.0
    %v480 = vmax.f32 %v414, 0.0
    %v481 = vmax.f32 %v419, 0.0
    %v482 = vmax.f32 %v424, 0.0
    %v483 = vmax.f32 %v429, 0.0
    %v484 = vmax.f32 %v434, 0.0
    %v485 = vmax.f32 %v439, 0.0
    %v486 = vmax.f32 %v444, 0.0
    %v487 = vmax.f32 %v449, 0.0
    %v488 = vmax.f32 %v454, 0.0
    %v489 = vmax.f32 %v459, 0.0
    %v490 = vmax.f32 %v464, 0.0
    %v491 = vmax.f32 %v469, 0.0
    %v492 = vmax.f32 %v474, 0.0
    %493 = vmatprep.subr.mxu0 0.0
    %494 = vmatpush1.msra.mxu0 %v492
    %495 = vmatprep.subr.mxu0 0.0
    %496 = vmatpush1.msra.mxu0 %v491
    %497 = vmatprep.subr.mxu0 0.0
    %498 = vmatpush1.msra.mxu0 %v490
    %499 = vmatprep.subr.mxu0 0.0
    %500 = vmatpush1.msra.mxu0 %v489
    %501 = vmatprep.subr.mxu0 0.0
    %502 = vmatpush1.msra.mxu0 %v488
    %503 = vmatprep.subr.mxu0 0.0
    %504 = vmatpush1.msra.mxu0 %v487
    %505 = vmatprep.subr.mxu0 0.0
    %506 = vmatpush1.msra.mxu0 %v486
    %507 = vmatprep.subr.mxu0 0.0
    %508 = vmatpush1.msra.mxu0 %v485
    %509 = vmatprep.subr.mxu0 0.0
    %510 = vmatpush1.msra.mxu0 %v484
    %511 = vmatprep.subr.mxu0 0.0
    %512 = vmatpush1.msra.mxu0 %v483
    %513 = vmatprep.subr.mxu0 0.0
    %514 = vmatpush1.msra.mxu0 %v482
    %515 = vmatprep.subr.mxu0 0.0
    %516 = vmatpush1.msra.mxu0 %v481
    %517 = vmatprep.subr.mxu0 0.0
    %518 = vmatpush1.msra.mxu0 %v480
    %519 = vmatprep.subr.mxu0 0.0
    %520 = vmatpush1.msra.mxu0 %v479
    %521 = vmatprep.subr.mxu0 0.0
    %522 = vmatpush1.msra.mxu0 %v478
    %523 = vmatprep.subr.mxu0 0.0
    %524 = vmatpush1.msra.mxu0 %v477
    %525 = vmatprep.subr.mxu0 0.0
    %526 = vmatpush2.msra.mxu0 0.0
    %527 = vmatprep.subr.mxu0 0.0
    %528 = vmatpush2.msra.mxu0 0.0
    %529 = vmatprep.subr.mxu0 0.0
    %530 = vmatpush2.msra.mxu0 0.0
    %531 = vmatprep.subr.mxu0 0.0
    %532 = vmatpush2.msra.mxu0 0.0
    %533 = vmatprep.subr.mxu0 0.0
    %534 = vmatpush2.msra.mxu0 0.0
    %535 = vmatprep.subr.mxu0 0.0
    %536 = vmatpush2.msra.mxu0 0.0
    %537 = vmatprep.subr.mxu0 0.0
    %538 = vmatpush2.msra.mxu0 0.0
    %539 = vmatprep.subr.mxu0 0.0
    %540 = vmatpush2.msra.mxu0 0.0
    %541 = vmatprep.subr.mxu0 0.0
    %542 = vmatpush2.msra.mxu0 0.0
    %543 = vmatprep.subr.mxu0 0.0
    %544 = vmatpush2.msra.mxu0 0.0
    %545 = vmatprep.subr.mxu0 0.0
    %546 = vmatpush2.msra.mxu0 0.0
    %547 = vmatprep.subr.mxu0 0.0
    %548 = vmatpush2.msra.mxu0 0.0
    %549 = vmatprep.subr.mxu0 0.0
    %550 = vmatpush2.msra.mxu0 0.0
    %551 = vmatprep.subr.mxu0 0.0
    %552 = vmatpush2.msra.mxu0 0.0
    %553 = vmatprep.subr.mxu0 0.0
    %554 = vmatpush2.msra.mxu0 0.0
    %555 = vmatprep.subr.mxu0 0.0
    %556 = vmatpush2.msra.mxu0 0.0
    %557 = vmatprep.mubr.f32.mxu0 0.0
    %558 = vmatmul.mubr.f32.gmra.mxu0 %v172
    %v559 = vpop.f32.mrf.mxu0
    %v560 = vadd.f32 0.0, %v559
    %v561 = vpop.f32.mrf.mxu0
    %562 = vmatprep.mubr.f32.mxu0 0.0
    %563 = vmatmul.mubr.f32.gmra.mxu0 %v173
    %v564 = vpop.f32.mrf.mxu0
    %v565 = vadd.f32 0.0, %v564
    %v566 = vpop.f32.mrf.mxu0
    %567 = vmatprep.mubr.f32.mxu0 0.0
    %568 = vmatmul.mubr.f32.gmra.mxu0 %v174
    %v569 = vpop.f32.mrf.mxu0
    %v570 = vadd.f32 0.0, %v569
    %v571 = vpop.f32.mrf.mxu0
    %572 = vmatprep.mubr.f32.mxu0 0.0
    %573 = vmatmul.mubr.f32.gmra.mxu0 %v175
    %v574 = vpop.f32.mrf.mxu0
    %v575 = vadd.f32 0.0, %v574
    %v576 = vpop.f32.mrf.mxu0
    %577 = vmatprep.mubr.f32.mxu0 0.0
    %578 = vmatmul.mubr.f32.gmra.mxu0 %v176
    %v579 = vpop.f32.mrf.mxu0
    %v580 = vadd.f32 0.0, %v579
    %v581 = vpop.f32.mrf.mxu0
    %582 = vmatprep.mubr.f32.mxu0 0.0
    %583 = vmatmul.mubr.f32.gmra.mxu0 %v177
    %v584 = vpop.f32.mrf.mxu0
    %v585 = vadd.f32 0.0, %v584
    %v586 = vpop.f32.mrf.mxu0
    %587 = vmatprep.mubr.f32.mxu0 0.0
    %588 = vmatmul.mubr.f32.gmra.mxu0 %v178
    %v589 = vpop.f32.mrf.mxu0
    %v590 = vadd.f32 0.0, %v589
    %v591 = vpop.f32.mrf.mxu0
    %592 = vmatprep.mubr.f32.mxu0 0.0
    %593 = vmatmul.mubr.f32.gmra.mxu0 %v179
    %v594 = vpop.f32.mrf.mxu0
    %v595 = vadd.f32 0.0, %v594
    %v596 = vpop.f32.mrf.mxu0
    %597 = vmatprep.mubr.f32.mxu0 0.0
    %598 = vmatmul.mubr.f32.gmra.mxu0 %v180
    %v599 = vpop.f32.mrf.mxu0
    %v600 = vadd.f32 0.0, %v599
    %v601 = vpop.f32.mrf.mxu0
    %602 = vmatprep.mubr.f32.mxu0 0.0
    %603 = vmatmul.mubr.f32.gmra.mxu0 %v181
    %v604 = vpop.f32.mrf.mxu0
    %v605 = vadd.f32 0.0, %v604
    %v606 = vpop.f32.mrf.mxu0
    %607 = vmatprep.mubr.f32.mxu0 0.0
    %608 = vmatmul.mubr.f32.gmra.mxu0 %v182
    %v609 = vpop.f32.mrf.mxu0
    %v610 = vadd.f32 0.0, %v609
    %v611 = vpop.f32.mrf.mxu0
    %612 = vmatprep.mubr.f32.mxu0 0.0
    %613 = vmatmul.mubr.f32.gmra.mxu0 %v183
    %v614 = vpop.f32.mrf.mxu0
    %v615 = vadd.f32 0.0, %v614
    %v616 = vpop.f32.mrf.mxu0
    %617 = vmatprep.mubr.f32.mxu0 0.0
    %618 = vmatmul.mubr.f32.gmra.mxu0 %v184
    %v619 = vpop.f32.mrf.mxu0
    %v620 = vadd.f32 0.0, %v619
    %v621 = vpop.f32.mrf.mxu0
    %622 = vmatprep.mubr.f32.mxu0 0.0
    %623 = vmatmul.mubr.f32.gmra.mxu0 %v185
    %v624 = vpop.f32.mrf.mxu0
    %v625 = vadd.f32 0.0, %v624
    %v626 = vpop.f32.mrf.mxu0
    %627 = vmatprep.mubr.f32.mxu0 0.0
    %628 = vmatmul.mubr.f32.gmra.mxu0 %v186
    %v629 = vpop.f32.mrf.mxu0
    %v630 = vadd.f32 0.0, %v629
    %v631 = vpop.f32.mrf.mxu0
    %632 = vmatprep.mubr.f32.mxu0 0.0
    %633 = vmatmul.mubr.f32.gmra.mxu0 %v187
    %v634 = vpop.f32.mrf.mxu0
    %v635 = vadd.f32 0.0, %v634
    %v636 = vpop.f32.mrf.mxu0
    %637 = vdwg.mxu0
    %638 = vmatprep.subr.mxu0 0.0
    %639 = vmatpush1.msra.mxu0 %v331
    %640 = vmatprep.subr.mxu0 0.0
    %641 = vmatpush1.msra.mxu0 %v330
    %642 = vmatprep.subr.mxu0 0.0
    %643 = vmatpush1.msra.mxu0 %v329
    %644 = vmatprep.subr.mxu0 0.0
    %645 = vmatpush1.msra.mxu0 %v328
    %646 = vmatprep.subr.mxu0 0.0
    %647 = vmatpush1.msra.mxu0 %v327
    %648 = vmatprep.subr.mxu0 0.0
    %649 = vmatpush1.msra.mxu0 %v326
    %650 = vmatprep.subr.mxu0 0.0
    %651 = vmatpush1.msra.mxu0 %v325
    %652 = vmatprep.subr.mxu0 0.0
    %653 = vmatpush1.msra.mxu0 %v324
    %654 = vmatprep.subr.mxu0 0.0
    %655 = vmatpush1.msra.mxu0 %v323
    %656 = vmatprep.subr.mxu0 0.0
    %657 = vmatpush1.msra.mxu0 %v322
    %658 = vmatprep.subr.mxu0 0.0
    %659 = vmatpush1.msra.mxu0 %v321
    %660 = vmatprep.subr.mxu0 0.0
    %661 = vmatpush1.msra.mxu0 %v320
    %662 = vmatprep.subr.mxu0 0.0
    %663 = vmatpush1.msra.mxu0 %v319
    %664 = vmatprep.subr.mxu0 0.0
    %665 = vmatpush1.msra.mxu0 %v318
    %666 = vmatprep.subr.mxu0 0.0
    %667 = vmatpush1.msra.mxu0 %v317
    %668 = vmatprep.subr.mxu0 0.0
    %669 = vmatpush1.msra.mxu0 %v316
    %670 = vmatprep.subr.mxu0 0.0
    %671 = vmatpush2.msra.mxu0 0.0
    %672 = vmatprep.subr.mxu0 0.0
    %673 = vmatpush2.msra.mxu0 0.0
    %674 = vmatprep.subr.mxu0 0.0
    %675 = vmatpush2.msra.mxu0 0.0
    %676 = vmatprep.subr.mxu0 0.0
    %677 = vmatpush2.msra.mxu0 0.0
    %678 = vmatprep.subr.mxu0 0.0
    %679 = vmatpush2.msra.mxu0 0.0
    %680 = vmatprep.subr.mxu0 0.0
    %681 = vmatpush2.msra.mxu0 0.0
    %682 = vmatprep.subr.mxu0 0.0
    %683 = vmatpush2.msra.mxu0 0.0
    %684 = vmatprep.subr.mxu0 0.0
    %685 = vmatpush2.msra.mxu0 0.0
    %686 = vmatprep.subr.mxu0 0.0
    %687 = vmatpush2.msra.mxu0 0.0
    %688 = vmatprep.subr.mxu0 0.0
    %689 = vmatpush2.msra.mxu0 0.0
    %690 = vmatprep.subr.mxu0 0.0
    %691 = vmatpush2.msra.mxu0 0.0
    %692 = vmatprep.subr.mxu0 0.0
    %693 = vmatpush2.msra.mxu0 0.0
    %694 = vmatprep.subr.mxu0 0.0
    %695 = vmatpush2.msra.mxu0 0.0
    %696 = vmatprep.subr.mxu0 0.0
    %697 = vmatpush2.msra.mxu0 0.0
    %698 = vmatprep.subr.mxu0 0.0
    %699 = vmatpush2.msra.mxu0 0.0
    %700 = vmatprep.subr.mxu0 0.0
    %701 = vmatpush2.msra.mxu0 0.0
    %702 = vmatprep.mubr.f32.mxu0 0.0
    %703 = vmatmul.mubr.f32.gmra.mxu0 %v560
    %v704 = vpop.f32.mrf.mxu0
    %v705 = vadd.f32 0.0, %v704
    %v706 = vpop.f32.mrf.mxu0
    %707 = vmatprep.mubr.f32.mxu0 0.0
    %708 = vmatmul.mubr.f32.gmra.mxu0 %v565
    %v709 = vpop.f32.mrf.mxu0
    %v710 = vadd.f32 0.0, %v709
    %v711 = vpop.f32.mrf.mxu0
    %712 = vmatprep.mubr.f32.mxu0 0.0
    %713 = vmatmul.mubr.f32.gmra.mxu0 %v570
    %v714 = vpop.f32.mrf.mxu0
    %v715 = vadd.f32 0.0, %v714
    %v716 = vpop.f32.mrf.mxu0
    %717 = vmatprep.mubr.f32.mxu0 0.0
    %718 = vmatmul.mubr.f32.gmra.mxu0 %v575
    %v719 = vpop.f32.mrf.mxu0
    %v720 = vadd.f32 0.0, %v719
    %v721 = vpop.f32.mrf.mxu0
    %722 = vmatprep.mubr.f32.mxu0 0.0
    %723 = vmatmul.mubr.f32.gmra.mxu0 %v580
    %v724 = vpop.f32.mrf.mxu0
    %v725 = vadd.f32 0.0, %v724
    %v726 = vpop.f32.mrf.mxu0
    %727 = vmatprep.mubr.f32.mxu0 0.0
    %728 = vmatmul.mubr.f32.gmra.mxu0 %v585
    %v729 = vpop.f32.mrf.mxu0
    %v730 = vadd.f32 0.0, %v729
    %v731 = vpop.f32.mrf.mxu0
    %732 = vmatprep.mubr.f32.mxu0 0.0
    %733 = vmatmul.mubr.f32.gmra.mxu0 %v590
    %v734 = vpop.f32.mrf.mxu0
    %v735 = vadd.f32 0.0, %v734
    %v736 = vpop.f32.mrf.mxu0
    %737 = vmatprep.mubr.f32.mxu0 0.0
    %738 = vmatmul.mubr.f32.gmra.mxu0 %v595
    %v739 = vpop.f32.mrf.mxu0
    %v740 = vadd.f32 0.0, %v739
    %v741 = vpop.f32.mrf.mxu0
    %742 = vmatprep.mubr.f32.mxu0 0.0
    %743 = vmatmul.mubr.f32.gmra.mxu0 %v600
    %v744 = vpop.f32.mrf.mxu0
    %v745 = vadd.f32 0.0, %v744
    %v746 = vpop.f32.mrf.mxu0
    %747 = vmatprep.mubr.f32.mxu0 0.0
    %748 = vmatmul.mubr.f32.gmra.mxu0 %v605
    %v749 = vpop.f32.mrf.mxu0
    %v750 = vadd.f32 0.0, %v749
    %v751 = vpop.f32.mrf.mxu0
    %752 = vmatprep.mubr.f32.mxu0 0.0
    %753 = vmatmul.mubr.f32.gmra.mxu0 %v610
    %v754 = vpop.f32.mrf.mxu0
    %v755 = vadd.f32 0.0, %v754
    %v756 = vpop.f32.mrf.mxu0
    %757 = vmatprep.mubr.f32.mxu0 0.0
    %758 = vmatmul.mubr.f32.gmra.mxu0 %v615
    %v759 = vpop.f32.mrf.mxu0
    %v760 = vadd.f32 0.0, %v759
    %v761 = vpop.f32.mrf.mxu0
    %762 = vmatprep.mubr.f32.mxu0 0.0
    %763 = vmatmul.mubr.f32.gmra.mxu0 %v620
    %v764 = vpop.f32.mrf.mxu0
    %v765 = vadd.f32 0.0, %v764
    %v766 = vpop.f32.mrf.mxu0
    %767 = vmatprep.mubr.f32.mxu0 0.0
    %768 = vmatmul.mubr.f32.gmra.mxu0 %v625
    %v769 = vpop.f32.mrf.mxu0
    %v770 = vadd.f32 0.0, %v769
    %v771 = vpop.f32.mrf.mxu0
    %772 = vmatprep.mubr.f32.mxu0 0.0
    %773 = vmatmul.mubr.f32.gmra.mxu0 %v630
    %v774 = vpop.f32.mrf.mxu0
    %v775 = vadd.f32 0.0, %v774
    %v776 = vpop.f32.mrf.mxu0
    %777 = vmatprep.mubr.f32.mxu0 0.0
    %778 = vmatmul.mubr.f32.gmra.mxu0 %v635
    %v779 = vpop.f32.mrf.mxu0
    %v780 = vadd.f32 0.0, %v779
    %v781 = vpop.f32.mrf.mxu0
    %782 = vdwg.mxu0
    %v783 = vadd.f32 %v399, %v705
    %v784 = vadd.f32 %v404, %v710
    %v785 = vadd.f32 %v409, %v715
    %v786 = vadd.f32 %v414, %v720
    %v787 = vadd.f32 %v419, %v725
    %v788 = vadd.f32 %v424, %v730
    %v789 = vadd.f32 %v429, %v735
    %v790 = vadd.f32 %v434, %v740
    %v791 = vadd.f32 %v439, %v745
    %v792 = vadd.f32 %v444, %v750
    %v793 = vadd.f32 %v449, %v755
    %v794 = vadd.f32 %v454, %v760
    %v795 = vadd.f32 %v459, %v765
    %v796 = vadd.f32 %v464, %v770
    %v797 = vadd.f32 %v469, %v775
    %v798 = vadd.f32 %v474, %v780
    %v799 = vmax.f32 %v783, 0.0
    %v800 = vmax.f32 %v784, 0.0
    %v801 = vmax.f32 %v785, 0.0
    %v802 = vmax.f32 %v786, 0.0
    %v803 = vmax.f32 %v787, 0.0
    %v804 = vmax.f32 %v788, 0.0
    %v805 = vmax.f32 %v789, 0.0
    %v806 = vmax.f32 %v790, 0.0
    %v807 = vmax.f32 %v791, 0.0
    %v808 = vmax.f32 %v792, 0.0
    %v809 = vmax.f32 %v793, 0.0
    %v810 = vmax.f32 %v794, 0.0
    %v811 = vmax.f32 %v795, 0.0
    %v812 = vmax.f32 %v796, 0.0
    %v813 = vmax.f32 %v797, 0.0
    %v814 = vmax.f32 %v798, 0.0
    %815 = vmatprep.subr.mxu0 0.0
    %816 = vmatpush1.msra.mxu0 %v814
    %817 = vmatprep.subr.mxu0 0.0
    %818 = vmatpush1.msra.mxu0 %v813
    %819 = vmatprep.subr.mxu0 0.0
    %820 = vmatpush1.msra.mxu0 %v812
    %821 = vmatprep.subr.mxu0 0.0
    %822 = vmatpush1.msra.mxu0 %v811
    %823 = vmatprep.subr.mxu0 0.0
    %824 = vmatpush1.msra.mxu0 %v810
    %825 = vmatprep.subr.mxu0 0.0
    %826 = vmatpush1.msra.mxu0 %v809
    %827 = vmatprep.subr.mxu0 0.0
    %828 = vmatpush1.msra.mxu0 %v808
    %829 = vmatprep.subr.mxu0 0.0
    %830 = vmatpush1.msra.mxu0 %v807
    %831 = vmatprep.subr.mxu0 0.0
    %832 = vmatpush1.msra.mxu0 %v806
    %833 = vmatprep.subr.mxu0 0.0
    %834 = vmatpush1.msra.mxu0 %v805
    %835 = vmatprep.subr.mxu0 0.0
    %836 = vmatpush1.msra.mxu0 %v804
    %837 = vmatprep.subr.mxu0 0.0
    %838 = vmatpush1.msra.mxu0 %v803
    %839 = vmatprep.subr.mxu0 0.0
    %840 = vmatpush1.msra.mxu0 %v802
    %841 = vmatprep.subr.mxu0 0.0
    %842 = vmatpush1.msra.mxu0 %v801
    %843 = vmatprep.subr.mxu0 0.0
    %844 = vmatpush1.msra.mxu0 %v800
    %845 = vmatprep.subr.mxu0 0.0
    %846 = vmatpush1.msra.mxu0 %v799
    %847 = vmatprep.subr.mxu0 0.0
    %848 = vmatpush2.msra.mxu0 0.0
    %849 = vmatprep.subr.mxu0 0.0
    %850 = vmatpush2.msra.mxu0 0.0
    %851 = vmatprep.subr.mxu0 0.0
    %852 = vmatpush2.msra.mxu0 0.0
    %853 = vmatprep.subr.mxu0 0.0
    %854 = vmatpush2.msra.mxu0 0.0
    %855 = vmatprep.subr.mxu0 0.0
    %856 = vmatpush2.msra.mxu0 0.0
    %857 = vmatprep.subr.mxu0 0.0
    %858 = vmatpush2.msra.mxu0 0.0
    %859 = vmatprep.subr.mxu0 0.0
    %860 = vmatpush2.msra.mxu0 0.0
    %861 = vmatprep.subr.mxu0 0.0
    %862 = vmatpush2.msra.mxu0 0.0
    %863 = vmatprep.subr.mxu0 0.0
    %864 = vmatpush2.msra.mxu0 0.0
    %865 = vmatprep.subr.mxu0 0.0
    %866 = vmatpush2.msra.mxu0 0.0
    %867 = vmatprep.subr.mxu0 0.0
    %868 = vmatpush2.msra.mxu0 0.0
    %869 = vmatprep.subr.mxu0 0.0
    %870 = vmatpush2.msra.mxu0 0.0
    %871 = vmatprep.subr.mxu0 0.0
    %872 = vmatpush2.msra.mxu0 0.0
    %873 = vmatprep.subr.mxu0 0.0
    %874 = vmatpush2.msra.mxu0 0.0
    %875 = vmatprep.subr.mxu0 0.0
    %876 = vmatpush2.msra.mxu0 0.0
    %877 = vmatprep.subr.mxu0 0.0
    %878 = vmatpush2.msra.mxu0 0.0
    %879 = vmatprep.mubr.f32.mxu0 0.0
    %880 = vmatmul.mubr.f32.gmra.mxu0 %v172
    %v881 = vpop.f32.mrf.mxu0
    %v882 = vadd.f32 0.0, %v881
    %v883 = vpop.f32.mrf.mxu0
    %884 = vmatprep.mubr.f32.mxu0 0.0
    %885 = vmatmul.mubr.f32.gmra.mxu0 %v173
    %v886 = vpop.f32.mrf.mxu0
    %v887 = vadd.f32 0.0, %v886
    %v888 = vpop.f32.mrf.mxu0
    %889 = vmatprep.mubr.f32.mxu0 0.0
    %890 = vmatmul.mubr.f32.gmra.mxu0 %v174
    %v891 = vpop.f32.mrf.mxu0
    %v892 = vadd.f32 0.0, %v891
    %v893 = vpop.f32.mrf.mxu0
    %894 = vmatprep.mubr.f32.mxu0 0.0
    %895 = vmatmul.mubr.f32.gmra.mxu0 %v175
    %v896 = vpop.f32.mrf.mxu0
    %v897 = vadd.f32 0.0, %v896
    %v898 = vpop.f32.mrf.mxu0
    %899 = vmatprep.mubr.f32.mxu0 0.0
    %900 = vmatmul.mubr.f32.gmra.mxu0 %v176
    %v901 = vpop.f32.mrf.mxu0
    %v902 = vadd.f32 0.0, %v901
    %v903 = vpop.f32.mrf.mxu0
    %904 = vmatprep.mubr.f32.mxu0 0.0
    %905 = vmatmul.mubr.f32.gmra.mxu0 %v177
    %v906 = vpop.f32.mrf.mxu0
    %v907 = vadd.f32 0.0, %v906
    %v908 = vpop.f32.mrf.mxu0
    %909 = vmatprep.mubr.f32.mxu0 0.0
    %910 = vmatmul.mubr.f32.gmra.mxu0 %v178
    %v911 = vpop.f32.mrf.mxu0
    %v912 = vadd.f32 0.0, %v911
    %v913 = vpop.f32.mrf.mxu0
    %914 = vmatprep.mubr.f32.mxu0 0.0
    %915 = vmatmul.mubr.f32.gmra.mxu0 %v179
    %v916 = vpop.f32.mrf.mxu0
    %v917 = vadd.f32 0.0, %v916
    %v918 = vpop.f32.mrf.mxu0
    %919 = vmatprep.mubr.f32.mxu0 0.0
    %920 = vmatmul.mubr.f32.gmra.mxu0 %v180
    %v921 = vpop.f32.mrf.mxu0
    %v922 = vadd.f32 0.0, %v921
    %v923 = vpop.f32.mrf.mxu0
    %924 = vmatprep.mubr.f32.mxu0 0.0
    %925 = vmatmul.mubr.f32.gmra.mxu0 %v181
    %v926 = vpop.f32.mrf.mxu0
    %v927 = vadd.f32 0.0, %v926
    %v928 = vpop.f32.mrf.mxu0
    %929 = vmatprep.mubr.f32.mxu0 0.0
    %930 = vmatmul.mubr.f32.gmra.mxu0 %v182
    %v931 = vpop.f32.mrf.mxu0
    %v932 = vadd.f32 0.0, %v931
    %v933 = vpop.f32.mrf.mxu0
    %934 = vmatprep.mubr.f32.mxu0 0.0
    %935 = vmatmul.mubr.f32.gmra.mxu0 %v183
    %v936 = vpop.f32.mrf.mxu0
    %v937 = vadd.f32 0.0, %v936
    %v938 = vpop.f32.mrf.mxu0
    %939 = vmatprep.mubr.f32.mxu0 0.0
    %940 = vmatmul.mubr.f32.gmra.mxu0 %v184
    %v941 = vpop.f32.mrf.mxu0
    %v942 = vadd.f32 0.0, %v941
    %v943 = vpop.f32.mrf.mxu0
    %944 = vmatprep.mubr.f32.mxu0 0.0
    %945 = vmatmul.mubr.f32.gmra.mxu0 %v185
    %v946 = vpop.f32.mrf.mxu0
    %v947 = vadd.f32 0.0, %v946
    %v948 = vpop.f32.mrf.mxu0
    %949 = vmatprep.mubr.f32.mxu0 0.0
    %950 = vmatmul.mubr.f32.gmra.mxu0 %v186
    %v951 = vpop.f32.mrf.mxu0
    %v952 = vadd.f32 0.0, %v951
    %v953 = vpop.f32.mrf.mxu0
    %954 = vmatprep.mubr.f32.mxu0 0.0
    %955 = vmatmul.mubr.f32.gmra.mxu0 %v187
    %v956 = vpop.f32.mrf.mxu0
    %v957 = vadd.f32 0.0, %v956
    %v958 = vpop.f32.mrf.mxu0
    %959 = vdwg.mxu0
    %960 = vmatprep.subr.mxu0 0.0
    %961 = vmatpush1.msra.mxu0 %v331
    %962 = vmatprep.subr.mxu0 0.0
    %963 = vmatpush1.msra.mxu0 %v330
    %964 = vmatprep.subr.mxu0 0.0
    %965 = vmatpush1.msra.mxu0 %v329
    %966 = vmatprep.subr.mxu0 0.0
    %967 = vmatpush1.msra.mxu0 %v328
    %968 = vmatprep.subr.mxu0 0.0
    %969 = vmatpush1.msra.mxu0 %v327
    %970 = vmatprep.subr.mxu0 0.0
    %971 = vmatpush1.msra.mxu0 %v326
    %972 = vmatprep.subr.mxu0 0.0
    %973 = vmatpush1.msra.mxu0 %v325
    %974 = vmatprep.subr.mxu0 0.0
    %975 = vmatpush1.msra.mxu0 %v324
    %976 = vmatprep.subr.mxu0 0.0
    %977 = vmatpush1.msra.mxu0 %v323
    %978 = vmatprep.subr.mxu0 0.0
    %979 = vmatpush1.msra.mxu0 %v322
    %980 = vmatprep.subr.mxu0 0.0
    %981 = vmatpush1.msra.mxu0 %v321
    %982 = vmatprep.subr.mxu0 0.0
    %983 = vmatpush1.msra.mxu0 %v320
    %984 = vmatprep.subr.mxu0 0.0
    %985 = vmatpush1.msra.mxu0 %v319
    %986 = vmatprep.subr.mxu0 0.0
    %987 = vmatpush1.msra.mxu0 %v318
    %988 = vmatprep.subr.mxu0 0.0
    %989 = vmatpush1.msra.mxu0 %v317
    %990 = vmatprep.subr.mxu0 0.0
    %991 = vmatpush1.msra.mxu0 %v316
    %992 = vmatprep.subr.mxu0 0.0
    %993 = vmatpush2.msra.mxu0 0.0
    %994 = vmatprep.subr.mxu0 0.0
    %995 = vmatpush2.msra.mxu0 0.0
    %996 = vmatprep.subr.mxu0 0.0
    %997 = vmatpush2.msra.mxu0 0.0
    %998 = vmatprep.subr.mxu0 0.0
    %999 = vmatpush2.msra.mxu0 0.0
    %1000 = vmatprep.subr.mxu0 0.0
    %1001 = vmatpush2.msra.mxu0 0.0
    %1002 = vmatprep.subr.mxu0 0.0
    %1003 = vmatpush2.msra.mxu0 0.0
    %1004 = vmatprep.subr.mxu0 0.0
    %1005 = vmatpush2.msra.mxu0 0.0
    %1006 = vmatprep.subr.mxu0 0.0
    %1007 = vmatpush2.msra.mxu0 0.0
    %1008 = vmatprep.subr.mxu0 0.0
    %1009 = vmatpush2.msra.mxu0 0.0
    %1010 = vmatprep.subr.mxu0 0.0
    %1011 = vmatpush2.msra.mxu0 0.0
    %1012 = vmatprep.subr.mxu0 0.0
    %1013 = vmatpush2.msra.mxu0 0.0
    %1014 = vmatprep.subr.mxu0 0.0
    %1015 = vmatpush2.msra.mxu0 0.0
    %1016 = vmatprep.subr.mxu0 0.0
    %1017 = vmatpush2.msra.mxu0 0.0
    %1018 = vmatprep.subr.mxu0 0.0
    %1019 = vmatpush2.msra.mxu0 0.0
    %1020 = vmatprep.subr.mxu0 0.0
    %1021 = vmatpush2.msra.mxu0 0.0
    %1022 = vmatprep.subr.mxu0 0.0
    %1023 = vmatpush2.msra.mxu0 0.0
    %1024 = vmatprep.mubr.f32.mxu0 0.0
    %1025 = vmatmul.mubr.f32.gmra.mxu0 %v882
    %v1026 = vpop.f32.mrf.mxu0
    %v1027 = vadd.f32 0.0, %v1026
    %v1028 = vpop.f32.mrf.mxu0
    %1029 = vmatprep.mubr.f32.mxu0 0.0
    %1030 = vmatmul.mubr.f32.gmra.mxu0 %v887
    %v1031 = vpop.f32.mrf.mxu0
    %v1032 = vadd.f32 0.0, %v1031
    %v1033 = vpop.f32.mrf.mxu0
    %1034 = vmatprep.mubr.f32.mxu0 0.0
    %1035 = vmatmul.mubr.f32.gmra.mxu0 %v892
    %v1036 = vpop.f32.mrf.mxu0
    %v1037 = vadd.f32 0.0, %v1036
    %v1038 = vpop.f32.mrf.mxu0
    %1039 = vmatprep.mubr.f32.mxu0 0.0
    %1040 = vmatmul.mubr.f32.gmra.mxu0 %v897
    %v1041 = vpop.f32.mrf.mxu0
    %v1042 = vadd.f32 0.0, %v1041
    %v1043 = vpop.f32.mrf.mxu0
    %1044 = vmatprep.mubr.f32.mxu0 0.0
    %1045 = vmatmul.mubr.f32.gmra.mxu0 %v902
    %v1046 = vpop.f32.mrf.mxu0
    %v1047 = vadd.f32 0.0, %v1046
    %v1048 = vpop.f32.mrf.mxu0
    %1049 = vmatprep.mubr.f32.mxu0 0.0
    %1050 = vmatmul.mubr.f32.gmra.mxu0 %v907
    %v1051 = vpop.f32.mrf.mxu0
    %v1052 = vadd.f32 0.0, %v1051
    %v1053 = vpop.f32.mrf.mxu0
    %1054 = vmatprep.mubr.f32.mxu0 0.0
    %1055 = vmatmul.mubr.f32.gmra.mxu0 %v912
    %v1056 = vpop.f32.mrf.mxu0
    %v1057 = vadd.f32 0.0, %v1056
    %v1058 = vpop.f32.mrf.mxu0
    %1059 = vmatprep.mubr.f32.mxu0 0.0
    %1060 = vmatmul.mubr.f32.gmra.mxu0 %v917
    %v1061 = vpop.f32.mrf.mxu0
    %v1062 = vadd.f32 0.0, %v1061
    %v1063 = vpop.f32.mrf.mxu0
    %1064 = vmatprep.mubr.f32.mxu0 0.0
    %1065 = vmatmul.mubr.f32.gmra.mxu0 %v922
    %v1066 = vpop.f32.mrf.mxu0
    %v1067 = vadd.f32 0.0, %v1066
    %v1068 = vpop.f32.mrf.mxu0
    %1069 = vmatprep.mubr.f32.mxu0 0.0
    %1070 = vmatmul.mubr.f32.gmra.mxu0 %v927
    %v1071 = vpop.f32.mrf.mxu0
    %v1072 = vadd.f32 0.0, %v1071
    %v1073 = vpop.f32.mrf.mxu0
    %1074 = vmatprep.mubr.f32.mxu0 0.0
    %1075 = vmatmul.mubr.f32.gmra.mxu0 %v932
    %v1076 = vpop.f32.mrf.mxu0
    %v1077 = vadd.f32 0.0, %v1076
    %v1078 = vpop.f32.mrf.mxu0
    %1079 = vmatprep.mubr.f32.mxu0 0.0
    %1080 = vmatmul.mubr.f32.gmra.mxu0 %v937
    %v1081 = vpop.f32.mrf.mxu0
    %v1082 = vadd.f32 0.0, %v1081
    %v1083 = vpop.f32.mrf.mxu0
    %1084 = vmatprep.mubr.f32.mxu0 0.0
    %1085 = vmatmul.mubr.f32.gmra.mxu0 %v942
    %v1086 = vpop.f32.mrf.mxu0
    %v1087 = vadd.f32 0.0, %v1086
    %v1088 = vpop.f32.mrf.mxu0
    %1089 = vmatprep.mubr.f32.mxu0 0.0
    %1090 = vmatmul.mubr.f32.gmra.mxu0 %v947
    %v1091 = vpop.f32.mrf.mxu0
    %v1092 = vadd.f32 0.0, %v1091
    %v1093 = vpop.f32.mrf.mxu0
    %1094 = vmatprep.mubr.f32.mxu0 0.0
    %1095 = vmatmul.mubr.f32.gmra.mxu0 %v952
    %v1096 = vpop.f32.mrf.mxu0
    %v1097 = vadd.f32 0.0, %v1096
    %v1098 = vpop.f32.mrf.mxu0
    %1099 = vmatprep.mubr.f32.mxu0 0.0
    %1100 = vmatmul.mubr.f32.gmra.mxu0 %v957
    %v1101 = vpop.f32.mrf.mxu0
    %v1102 = vadd.f32 0.0, %v1101
    %v1103 = vpop.f32.mrf.mxu0
    %1104 = vdwg.mxu0
    %v1105 = vadd.f32 %v399, %v1027
    %v1106 = vadd.f32 %v404, %v1032
    %v1107 = vadd.f32 %v409, %v1037
    %v1108 = vadd.f32 %v414, %v1042
    %v1109 = vadd.f32 %v419, %v1047
    %v1110 = vadd.f32 %v424, %v1052
    %v1111 = vadd.f32 %v429, %v1057
    %v1112 = vadd.f32 %v434, %v1062
    %v1113 = vadd.f32 %v439, %v1067
    %v1114 = vadd.f32 %v444, %v1072
    %v1115 = vadd.f32 %v449, %v1077
    %v1116 = vadd.f32 %v454, %v1082
    %v1117 = vadd.f32 %v459, %v1087
    %v1118 = vadd.f32 %v464, %v1092
    %v1119 = vadd.f32 %v469, %v1097
    %v1120 = vadd.f32 %v474, %v1102
    %v1121 = vmax.f32 %v1105, 0.0
    %v1122 = vmax.f32 %v1106, 0.0
    %v1123 = vmax.f32 %v1107, 0.0
    %v1124 = vmax.f32 %v1108, 0.0
    %v1125 = vmax.f32 %v1109, 0.0
    %v1126 = vmax.f32 %v1110, 0.0
    %v1127 = vmax.f32 %v1111, 0.0
    %v1128 = vmax.f32 %v1112, 0.0
    %v1129 = vmax.f32 %v1113, 0.0
    %v1130 = vmax.f32 %v1114, 0.0
    %v1131 = vmax.f32 %v1115, 0.0
    %v1132 = vmax.f32 %v1116, 0.0
    %v1133 = vmax.f32 %v1117, 0.0
    %v1134 = vmax.f32 %v1118, 0.0
    %v1135 = vmax.f32 %v1119, 0.0
    %v1136 = vmax.f32 %v1120, 0.0
    %1137 = vmatprep.subr.mxu0 0.0
    %1138 = vmatpush1.msra.mxu0 %v1136
    %1139 = vmatprep.subr.mxu0 0.0
    %1140 = vmatpush1.msra.mxu0 %v1135
    %1141 = vmatprep.subr.mxu0 0.0
    %1142 = vmatpush1.msra.mxu0 %v1134
    %1143 = vmatprep.subr.mxu0 0.0
    %1144 = vmatpush1.msra.mxu0 %v1133
    %1145 = vmatprep.subr.mxu0 0.0
    %1146 = vmatpush1.msra.mxu0 %v1132
    %1147 = vmatprep.subr.mxu0 0.0
    %1148 = vmatpush1.msra.mxu0 %v1131
    %1149 = vmatprep.subr.mxu0 0.0
    %1150 = vmatpush1.msra.mxu0 %v1130
    %1151 = vmatprep.subr.mxu0 0.0
    %1152 = vmatpush1.msra.mxu0 %v1129
    %1153 = vmatprep.subr.mxu0 0.0
    %1154 = vmatpush1.msra.mxu0 %v1128
    %1155 = vmatprep.subr.mxu0 0.0
    %1156 = vmatpush1.msra.mxu0 %v1127
    %1157 = vmatprep.subr.mxu0 0.0
    %1158 = vmatpush1.msra.mxu0 %v1126
    %1159 = vmatprep.subr.mxu0 0.0
    %1160 = vmatpush1.msra.mxu0 %v1125
    %1161 = vmatprep.subr.mxu0 0.0
    %1162 = vmatpush1.msra.mxu0 %v1124
    %1163 = vmatprep.subr.mxu0 0.0
    %1164 = vmatpush1.msra.mxu0 %v1123
    %1165 = vmatprep.subr.mxu0 0.0
    %1166 = vmatpush1.msra.mxu0 %v1122
    %1167 = vmatprep.subr.mxu0 0.0
    %1168 = vmatpush1.msra.mxu0 %v1121
    %1169 = vmatprep.subr.mxu0 0.0
    %1170 = vmatpush2.msra.mxu0 0.0
    %1171 = vmatprep.subr.mxu0 0.0
    %1172 = vmatpush2.msra.mxu0 0.0
    %1173 = vmatprep.subr.mxu0 0.0
    %1174 = vmatpush2.msra.mxu0 0.0
    %1175 = vmatprep.subr.mxu0 0.0
    %1176 = vmatpush2.msra.mxu0 0.0
    %1177 = vmatprep.subr.mxu0 0.0
    %1178 = vmatpush2.msra.mxu0 0.0
    %1179 = vmatprep.subr.mxu0 0.0
    %1180 = vmatpush2.msra.mxu0 0.0
    %1181 = vmatprep.subr.mxu0 0.0
    %1182 = vmatpush2.msra.mxu0 0.0
    %1183 = vmatprep.subr.mxu0 0.0
    %1184 = vmatpush2.msra.mxu0 0.0
    %1185 = vmatprep.subr.mxu0 0.0
    %1186 = vmatpush2.msra.mxu0 0.0
    %1187 = vmatprep.subr.mxu0 0.0
    %1188 = vmatpush2.msra.mxu0 0.0
    %1189 = vmatprep.subr.mxu0 0.0
    %1190 = vmatpush2.msra.mxu0 0.0
    %1191 = vmatprep.subr.mxu0 0.0
    %1192 = vmatpush2.msra.mxu0 0.0
    %1193 = vmatprep.subr.mxu0 0.0
    %1194 = vmatpush2.msra.mxu0 0.0
    %1195 = vmatprep.subr.mxu0 0.0
    %1196 = vmatpush2.msra.mxu0 0.0
    %1197 = vmatprep.subr.mxu0 0.0
    %1198 = vmatpush2.msra.mxu0 0.0
    %1199 = vmatprep.subr.mxu0 0.0
    %1200 = vmatpush2.msra.mxu0 0.0
    %1201 = vmatprep.mubr.f32.mxu0 0.0
    %1202 = vmatmul.mubr.f32.gmra.mxu0 %v204
    %v1203 = vpop.f32.mrf.mxu0
    %v1204 = vadd.f32 0.0, %v1203
    %v1205 = vpop.f32.mrf.mxu0
    %1206 = vmatprep.mubr.f32.mxu0 0.0
    %1207 = vmatmul.mubr.f32.gmra.mxu0 %v205
    %v1208 = vpop.f32.mrf.mxu0
    %v1209 = vadd.f32 0.0, %v1208
    %v1210 = vpop.f32.mrf.mxu0
    %1211 = vmatprep.mubr.f32.mxu0 0.0
    %1212 = vmatmul.mubr.f32.gmra.mxu0 %v206
    %v1213 = vpop.f32.mrf.mxu0
    %v1214 = vadd.f32 0.0, %v1213
    %v1215 = vpop.f32.mrf.mxu0
    %1216 = vmatprep.mubr.f32.mxu0 0.0
    %1217 = vmatmul.mubr.f32.gmra.mxu0 %v207
    %v1218 = vpop.f32.mrf.mxu0
    %v1219 = vadd.f32 0.0, %v1218
    %v1220 = vpop.f32.mrf.mxu0
    %1221 = vmatprep.mubr.f32.mxu0 0.0
    %1222 = vmatmul.mubr.f32.gmra.mxu0 %v208
    %v1223 = vpop.f32.mrf.mxu0
    %v1224 = vadd.f32 0.0, %v1223
    %v1225 = vpop.f32.mrf.mxu0
    %1226 = vmatprep.mubr.f32.mxu0 0.0
    %1227 = vmatmul.mubr.f32.gmra.mxu0 %v209
    %v1228 = vpop.f32.mrf.mxu0
    %v1229 = vadd.f32 0.0, %v1228
    %v1230 = vpop.f32.mrf.mxu0
    %1231 = vmatprep.mubr.f32.mxu0 0.0
    %1232 = vmatmul.mubr.f32.gmra.mxu0 %v210
    %v1233 = vpop.f32.mrf.mxu0
    %v1234 = vadd.f32 0.0, %v1233
    %v1235 = vpop.f32.mrf.mxu0
    %1236 = vmatprep.mubr.f32.mxu0 0.0
    %1237 = vmatmul.mubr.f32.gmra.mxu0 %v211
    %v1238 = vpop.f32.mrf.mxu0
    %v1239 = vadd.f32 0.0, %v1238
    %v1240 = vpop.f32.mrf.mxu0
    %1241 = vmatprep.mubr.f32.mxu0 0.0
    %1242 = vmatmul.mubr.f32.gmra.mxu0 %v212
    %v1243 = vpop.f32.mrf.mxu0
    %v1244 = vadd.f32 0.0, %v1243
    %v1245 = vpop.f32.mrf.mxu0
    %1246 = vmatprep.mubr.f32.mxu0 0.0
    %1247 = vmatmul.mubr.f32.gmra.mxu0 %v213
    %v1248 = vpop.f32.mrf.mxu0
    %v1249 = vadd.f32 0.0, %v1248
    %v1250 = vpop.f32.mrf.mxu0
    %1251 = vmatprep.mubr.f32.mxu0 0.0
    %1252 = vmatmul.mubr.f32.gmra.mxu0 %v214
    %v1253 = vpop.f32.mrf.mxu0
    %v1254 = vadd.f32 0.0, %v1253
    %v1255 = vpop.f32.mrf.mxu0
    %1256 = vmatprep.mubr.f32.mxu0 0.0
    %1257 = vmatmul.mubr.f32.gmra.mxu0 %v215
    %v1258 = vpop.f32.mrf.mxu0
    %v1259 = vadd.f32 0.0, %v1258
    %v1260 = vpop.f32.mrf.mxu0
    %1261 = vmatprep.mubr.f32.mxu0 0.0
    %1262 = vmatmul.mubr.f32.gmra.mxu0 %v216
    %v1263 = vpop.f32.mrf.mxu0
    %v1264 = vadd.f32 0.0, %v1263
    %v1265 = vpop.f32.mrf.mxu0
    %1266 = vmatprep.mubr.f32.mxu0 0.0
    %1267 = vmatmul.mubr.f32.gmra.mxu0 %v217
    %v1268 = vpop.f32.mrf.mxu0
    %v1269 = vadd.f32 0.0, %v1268
    %v1270 = vpop.f32.mrf.mxu0
    %1271 = vmatprep.mubr.f32.mxu0 0.0
    %1272 = vmatmul.mubr.f32.gmra.mxu0 %v218
    %v1273 = vpop.f32.mrf.mxu0
    %v1274 = vadd.f32 0.0, %v1273
    %v1275 = vpop.f32.mrf.mxu0
    %1276 = vmatprep.mubr.f32.mxu0 0.0
    %1277 = vmatmul.mubr.f32.gmra.mxu0 %v219
    %v1278 = vpop.f32.mrf.mxu0
    %v1279 = vadd.f32 0.0, %v1278
    %v1280 = vpop.f32.mrf.mxu0
    %1281 = vdwg.mxu0
    %v1282 = vld [vmem:[#allocation14] sm:$0xff]
    %v1283 = vld [vmem:[#allocation14 + $0x8] sm:$0xff]
    %v1284 = vld [vmem:[#allocation14 + $0x10] sm:$0xff]
    %v1285 = vld [vmem:[#allocation14 + $0x18] sm:$0xff]
    %v1286 = vld [vmem:[#allocation14 + $0x20] sm:$0xff]
    %v1287 = vld [vmem:[#allocation14 + $0x28] sm:$0xff]
    %v1288 = vld [vmem:[#allocation14 + $0x30] sm:$0xff]
    %v1289 = vld [vmem:[#allocation14 + $0x38] sm:$0xff]
    %v1290 = vld [vmem:[#allocation14 + $0x40] sm:$0xff]
    %v1291 = vld [vmem:[#allocation14 + $0x48] sm:$0xff]
    %v1292 = vld [vmem:[#allocation14 + $0x50] sm:$0xff]
    %v1293 = vld [vmem:[#allocation14 + $0x58] sm:$0xff]
    %v1294 = vld [vmem:[#allocation14 + $0x60] sm:$0xff]
    %v1295 = vld [vmem:[#allocation14 + $0x68] sm:$0xff]
    %v1296 = vld [vmem:[#allocation14 + $0x70] sm:$0xff]
    %v1297 = vld [vmem:[#allocation14 + $0x78] sm:$0xff]
    %v1298 = vld [vmem:[#allocation14 + $0x80] sm:$0xff]
    %v1299 = vld [vmem:[#allocation14 + $0x88] sm:$0xff]
    %v1300 = vld [vmem:[#allocation14 + $0x90] sm:$0xff]
    %v1301 = vld [vmem:[#allocation14 + $0x98] sm:$0xff]
    %v1302 = vld [vmem:[#allocation14 + $0xa0] sm:$0xff]
    %v1303 = vld [vmem:[#allocation14 + $0xa8] sm:$0xff]
    %v1304 = vld [vmem:[#allocation14 + $0xb0] sm:$0xff]
    %v1305 = vld [vmem:[#allocation14 + $0xb8] sm:$0xff]
    %v1306 = vld [vmem:[#allocation14 + $0xc0] sm:$0xff]
    %v1307 = vld [vmem:[#allocation14 + $0xc8] sm:$0xff]
    %v1308 = vld [vmem:[#allocation14 + $0xd0] sm:$0xff]
    %v1309 = vld [vmem:[#allocation14 + $0xd8] sm:$0xff]
    %v1310 = vld [vmem:[#allocation14 + $0xe0] sm:$0xff]
    %v1311 = vld [vmem:[#allocation14 + $0xe8] sm:$0xff]
    %v1312 = vld [vmem:[#allocation14 + $0xf0] sm:$0xff]
    %v1313 = vld [vmem:[#allocation14 + $0xf8] sm:$0xff]
    %v1314 = vld [vmem:[#allocation16] sm:$0xff]
    %v1315 = vld [vmem:[#allocation16 + $0x8] sm:$0xff]
    %v1316 = vld [vmem:[#allocation16 + $0x10] sm:$0xff]
    %v1317 = vld [vmem:[#allocation16 + $0x18] sm:$0xff]
    %v1318 = vld [vmem:[#allocation16 + $0x20] sm:$0xff]
    %v1319 = vld [vmem:[#allocation16 + $0x28] sm:$0xff]
    %v1320 = vld [vmem:[#allocation16 + $0x30] sm:$0xff]
    %v1321 = vld [vmem:[#allocation16 + $0x38] sm:$0xff]
    %v1322 = vld [vmem:[#allocation16 + $0x40] sm:$0xff]
    %v1323 = vld [vmem:[#allocation16 + $0x48] sm:$0xff]
    %v1324 = vld [vmem:[#allocation16 + $0x50] sm:$0xff]
    %v1325 = vld [vmem:[#allocation16 + $0x58] sm:$0xff]
    %v1326 = vld [vmem:[#allocation16 + $0x60] sm:$0xff]
    %v1327 = vld [vmem:[#allocation16 + $0x68] sm:$0xff]
    %v1328 = vld [vmem:[#allocation16 + $0x70] sm:$0xff]
    %v1329 = vld [vmem:[#allocation16 + $0x78] sm:$0xff]
    %1330 = vmatprep.subr.mxu0 0.0
    %1331 = vmatpush1.msra.mxu0 %v1329
    %1332 = vmatprep.subr.mxu0 0.0
    %1333 = vmatpush1.msra.mxu0 %v1328
    %1334 = vmatprep.subr.mxu0 0.0
    %1335 = vmatpush1.msra.mxu0 %v1327
    %1336 = vmatprep.subr.mxu0 0.0
    %1337 = vmatpush1.msra.mxu0 %v1326
    %1338 = vmatprep.subr.mxu0 0.0
    %1339 = vmatpush1.msra.mxu0 %v1325
    %1340 = vmatprep.subr.mxu0 0.0
    %1341 = vmatpush1.msra.mxu0 %v1324
    %1342 = vmatprep.subr.mxu0 0.0
    %1343 = vmatpush1.msra.mxu0 %v1323
    %1344 = vmatprep.subr.mxu0 0.0
    %1345 = vmatpush1.msra.mxu0 %v1322
    %1346 = vmatprep.subr.mxu0 0.0
    %1347 = vmatpush1.msra.mxu0 %v1321
    %1348 = vmatprep.subr.mxu0 0.0
    %1349 = vmatpush1.msra.mxu0 %v1320
    %1350 = vmatprep.subr.mxu0 0.0
    %1351 = vmatpush1.msra.mxu0 %v1319
    %1352 = vmatprep.subr.mxu0 0.0
    %1353 = vmatpush1.msra.mxu0 %v1318
    %1354 = vmatprep.subr.mxu0 0.0
    %1355 = vmatpush1.msra.mxu0 %v1317
    %1356 = vmatprep.subr.mxu0 0.0
    %1357 = vmatpush1.msra.mxu0 %v1316
    %1358 = vmatprep.subr.mxu0 0.0
    %1359 = vmatpush1.msra.mxu0 %v1315
    %1360 = vmatprep.subr.mxu0 0.0
    %1361 = vmatpush1.msra.mxu0 %v1314
    %1362 = vmatprep.subr.mxu0 0.0
    %1363 = vmatpush2.msra.mxu0 0.0
    %1364 = vmatprep.subr.mxu0 0.0
    %1365 = vmatpush2.msra.mxu0 0.0
    %1366 = vmatprep.subr.mxu0 0.0
    %1367 = vmatpush2.msra.mxu0 0.0
    %1368 = vmatprep.subr.mxu0 0.0
    %1369 = vmatpush2.msra.mxu0 0.0
    %1370 = vmatprep.subr.mxu0 0.0
    %1371 = vmatpush2.msra.mxu0 0.0
    %1372 = vmatprep.subr.mxu0 0.0
    %1373 = vmatpush2.msra.mxu0 0.0
    %1374 = vmatprep.subr.mxu0 0.0
    %1375 = vmatpush2.msra.mxu0 0.0
    %1376 = vmatprep.subr.mxu0 0.0
    %1377 = vmatpush2.msra.mxu0 0.0
    %1378 = vmatprep.subr.mxu0 0.0
    %1379 = vmatpush2.msra.mxu0 0.0
    %1380 = vmatprep.subr.mxu0 0.0
    %1381 = vmatpush2.msra.mxu0 0.0
    %1382 = vmatprep.subr.mxu0 0.0
    %1383 = vmatpush2.msra.mxu0 0.0
    %1384 = vmatprep.subr.mxu0 0.0
    %1385 = vmatpush2.msra.mxu0 0.0
    %1386 = vmatprep.subr.mxu0 0.0
    %1387 = vmatpush2.msra.mxu0 0.0
    %1388 = vmatprep.subr.mxu0 0.0
    %1389 = vmatpush2.msra.mxu0 0.0
    %1390 = vmatprep.subr.mxu0 0.0
    %1391 = vmatpush2.msra.mxu0 0.0
    %1392 = vmatprep.subr.mxu0 0.0
    %1393 = vmatpush2.msra.mxu0 0.0
    %1394 = vmatprep.mubr.f32.mxu0 0.0
    %1395 = vmatmul.mubr.f32.gmra.mxu0 %v1204
    %v1396 = vpop.f32.mrf.mxu0
    %v1397 = vadd.f32 0.0, %v1396
    %v1398 = vpop.f32.mrf.mxu0
    %1399 = vmatprep.mubr.f32.mxu0 0.0
    %1400 = vmatmul.mubr.f32.gmra.mxu0 %v1209
    %v1401 = vpop.f32.mrf.mxu0
    %v1402 = vadd.f32 0.0, %v1401
    %v1403 = vpop.f32.mrf.mxu0
    %1404 = vmatprep.mubr.f32.mxu0 0.0
    %1405 = vmatmul.mubr.f32.gmra.mxu0 %v1214
    %v1406 = vpop.f32.mrf.mxu0
    %v1407 = vadd.f32 0.0, %v1406
    %v1408 = vpop.f32.mrf.mxu0
    %1409 = vmatprep.mubr.f32.mxu0 0.0
    %1410 = vmatmul.mubr.f32.gmra.mxu0 %v1219
    %v1411 = vpop.f32.mrf.mxu0
    %v1412 = vadd.f32 0.0, %v1411
    %v1413 = vpop.f32.mrf.mxu0
    %1414 = vmatprep.mubr.f32.mxu0 0.0
    %1415 = vmatmul.mubr.f32.gmra.mxu0 %v1224
    %v1416 = vpop.f32.mrf.mxu0
    %v1417 = vadd.f32 0.0, %v1416
    %v1418 = vpop.f32.mrf.mxu0
    %1419 = vmatprep.mubr.f32.mxu0 0.0
    %1420 = vmatmul.mubr.f32.gmra.mxu0 %v1229
    %v1421 = vpop.f32.mrf.mxu0
    %v1422 = vadd.f32 0.0, %v1421
    %v1423 = vpop.f32.mrf.mxu0
    %1424 = vmatprep.mubr.f32.mxu0 0.0
    %1425 = vmatmul.mubr.f32.gmra.mxu0 %v1234
    %v1426 = vpop.f32.mrf.mxu0
    %v1427 = vadd.f32 0.0, %v1426
    %v1428 = vpop.f32.mrf.mxu0
    %1429 = vmatprep.mubr.f32.mxu0 0.0
    %1430 = vmatmul.mubr.f32.gmra.mxu0 %v1239
    %v1431 = vpop.f32.mrf.mxu0
    %v1432 = vadd.f32 0.0, %v1431
    %v1433 = vpop.f32.mrf.mxu0
    %1434 = vmatprep.mubr.f32.mxu0 0.0
    %1435 = vmatmul.mubr.f32.gmra.mxu0 %v1244
    %v1436 = vpop.f32.mrf.mxu0
    %v1437 = vadd.f32 0.0, %v1436
    %v1438 = vpop.f32.mrf.mxu0
    %1439 = vmatprep.mubr.f32.mxu0 0.0
    %1440 = vmatmul.mubr.f32.gmra.mxu0 %v1249
    %v1441 = vpop.f32.mrf.mxu0
    %v1442 = vadd.f32 0.0, %v1441
    %v1443 = vpop.f32.mrf.mxu0
    %1444 = vmatprep.mubr.f32.mxu0 0.0
    %1445 = vmatmul.mubr.f32.gmra.mxu0 %v1254
    %v1446 = vpop.f32.mrf.mxu0
    %v1447 = vadd.f32 0.0, %v1446
    %v1448 = vpop.f32.mrf.mxu0
    %1449 = vmatprep.mubr.f32.mxu0 0.0
    %1450 = vmatmul.mubr.f32.gmra.mxu0 %v1259
    %v1451 = vpop.f32.mrf.mxu0
    %v1452 = vadd.f32 0.0, %v1451
    %v1453 = vpop.f32.mrf.mxu0
    %1454 = vmatprep.mubr.f32.mxu0 0.0
    %1455 = vmatmul.mubr.f32.gmra.mxu0 %v1264
    %v1456 = vpop.f32.mrf.mxu0
    %v1457 = vadd.f32 0.0, %v1456
    %v1458 = vpop.f32.mrf.mxu0
    %1459 = vmatprep.mubr.f32.mxu0 0.0
    %1460 = vmatmul.mubr.f32.gmra.mxu0 %v1269
    %v1461 = vpop.f32.mrf.mxu0
    %v1462 = vadd.f32 0.0, %v1461
    %v1463 = vpop.f32.mrf.mxu0
    %1464 = vmatprep.mubr.f32.mxu0 0.0
    %1465 = vmatmul.mubr.f32.gmra.mxu0 %v1274
    %v1466 = vpop.f32.mrf.mxu0
    %v1467 = vadd.f32 0.0, %v1466
    %v1468 = vpop.f32.mrf.mxu0
    %1469 = vmatprep.mubr.f32.mxu0 0.0
    %1470 = vmatmul.mubr.f32.gmra.mxu0 %v1279
    %v1471 = vpop.f32.mrf.mxu0
    %v1472 = vadd.f32 0.0, %v1471
    %v1473 = vpop.f32.mrf.mxu0
    %1474 = vdwg.mxu0
    %1475 = vmatprep.subr.mxu0 0.0
    %1476 = vmatpush1.msra.mxu0 %v1297
    %1477 = vmatprep.subr.mxu0 0.0
    %1478 = vmatpush1.msra.mxu0 %v1296
    %1479 = vmatprep.subr.mxu0 0.0
    %1480 = vmatpush1.msra.mxu0 %v1295
    %1481 = vmatprep.subr.mxu0 0.0
    %1482 = vmatpush1.msra.mxu0 %v1294
    %1483 = vmatprep.subr.mxu0 0.0
    %1484 = vmatpush1.msra.mxu0 %v1293
    %1485 = vmatprep.subr.mxu0 0.0
    %1486 = vmatpush1.msra.mxu0 %v1292
    %1487 = vmatprep.subr.mxu0 0.0
    %1488 = vmatpush1.msra.mxu0 %v1291
    %1489 = vmatprep.subr.mxu0 0.0
    %1490 = vmatpush1.msra.mxu0 %v1290
    %1491 = vmatprep.subr.mxu0 0.0
    %1492 = vmatpush1.msra.mxu0 %v1289
    %1493 = vmatprep.subr.mxu0 0.0
    %1494 = vmatpush1.msra.mxu0 %v1288
    %1495 = vmatprep.subr.mxu0 0.0
    %1496 = vmatpush1.msra.mxu0 %v1287
    %1497 = vmatprep.subr.mxu0 0.0
    %1498 = vmatpush1.msra.mxu0 %v1286
    %1499 = vmatprep.subr.mxu0 0.0
    %1500 = vmatpush1.msra.mxu0 %v1285
    %1501 = vmatprep.subr.mxu0 0.0
    %1502 = vmatpush1.msra.mxu0 %v1284
    %1503 = vmatprep.subr.mxu0 0.0
    %1504 = vmatpush1.msra.mxu0 %v1283
    %1505 = vmatprep.subr.mxu0 0.0
    %1506 = vmatpush1.msra.mxu0 %v1282
    %1507 = vmatprep.subr.mxu0 0.0
    %1508 = vmatpush2.msra.mxu0 %v1313
    %1509 = vmatprep.subr.mxu0 0.0
    %1510 = vmatpush2.msra.mxu0 %v1312
    %1511 = vmatprep.subr.mxu0 0.0
    %1512 = vmatpush2.msra.mxu0 %v1311
    %1513 = vmatprep.subr.mxu0 0.0
    %1514 = vmatpush2.msra.mxu0 %v1310
    %1515 = vmatprep.subr.mxu0 0.0
    %1516 = vmatpush2.msra.mxu0 %v1309
    %1517 = vmatprep.subr.mxu0 0.0
    %1518 = vmatpush2.msra.mxu0 %v1308
    %1519 = vmatprep.subr.mxu0 0.0
    %1520 = vmatpush2.msra.mxu0 %v1307
    %1521 = vmatprep.subr.mxu0 0.0
    %1522 = vmatpush2.msra.mxu0 %v1306
    %1523 = vmatprep.subr.mxu0 0.0
    %1524 = vmatpush2.msra.mxu0 %v1305
    %1525 = vmatprep.subr.mxu0 0.0
    %1526 = vmatpush2.msra.mxu0 %v1304
    %1527 = vmatprep.subr.mxu0 0.0
    %1528 = vmatpush2.msra.mxu0 %v1303
    %1529 = vmatprep.subr.mxu0 0.0
    %1530 = vmatpush2.msra.mxu0 %v1302
    %1531 = vmatprep.subr.mxu0 0.0
    %1532 = vmatpush2.msra.mxu0 %v1301
    %1533 = vmatprep.subr.mxu0 0.0
    %1534 = vmatpush2.msra.mxu0 %v1300
    %1535 = vmatprep.subr.mxu0 0.0
    %1536 = vmatpush2.msra.mxu0 %v1299
    %1537 = vmatprep.subr.mxu0 0.0
    %1538 = vmatpush2.msra.mxu0 %v1298
    %1539 = vmatprep.mubr.f32.mxu0 %v253
    %1540 = vmatmul.mubr.f32.gmra.mxu0 %v252
    %v1541 = vpop.f32.mrf.mxu0
    %v1542 = vadd.f32 %v1397, %v1541
    %v1543 = vpop.f32.mrf.mxu0
    %1544 = vmatprep.mubr.f32.mxu0 %v255
    %1545 = vmatmul.mubr.f32.gmra.mxu0 %v254
    %v1546 = vpop.f32.mrf.mxu0
    %v1547 = vadd.f32 %v1402, %v1546
    %v1548 = vpop.f32.mrf.mxu0
    %1549 = vmatprep.mubr.f32.mxu0 %v257
    %1550 = vmatmul.mubr.f32.gmra.mxu0 %v256
    %v1551 = vpop.f32.mrf.mxu0
    %v1552 = vadd.f32 %v1407, %v1551
    %v1553 = vpop.f32.mrf.mxu0
    %1554 = vmatprep.mubr.f32.mxu0 %v259
    %1555 = vmatmul.mubr.f32.gmra.mxu0 %v258
    %v1556 = vpop.f32.mrf.mxu0
    %v1557 = vadd.f32 %v1412, %v1556
    %v1558 = vpop.f32.mrf.mxu0
    %1559 = vmatprep.mubr.f32.mxu0 %v261
    %1560 = vmatmul.mubr.f32.gmra.mxu0 %v260
    %v1561 = vpop.f32.mrf.mxu0
    %v1562 = vadd.f32 %v1417, %v1561
    %v1563 = vpop.f32.mrf.mxu0
    %1564 = vmatprep.mubr.f32.mxu0 %v263
    %1565 = vmatmul.mubr.f32.gmra.mxu0 %v262
    %v1566 = vpop.f32.mrf.mxu0
    %v1567 = vadd.f32 %v1422, %v1566
    %v1568 = vpop.f32.mrf.mxu0
    %1569 = vmatprep.mubr.f32.mxu0 %v265
    %1570 = vmatmul.mubr.f32.gmra.mxu0 %v264
    %v1571 = vpop.f32.mrf.mxu0
    %v1572 = vadd.f32 %v1427, %v1571
    %v1573 = vpop.f32.mrf.mxu0
    %1574 = vmatprep.mubr.f32.mxu0 %v267
    %1575 = vmatmul.mubr.f32.gmra.mxu0 %v266
    %v1576 = vpop.f32.mrf.mxu0
    %v1577 = vadd.f32 %v1432, %v1576
    %v1578 = vpop.f32.mrf.mxu0
    %1579 = vmatprep.mubr.f32.mxu0 %v269
    %1580 = vmatmul.mubr.f32.gmra.mxu0 %v268
    %v1581 = vpop.f32.mrf.mxu0
    %v1582 = vadd.f32 %v1437, %v1581
    %v1583 = vpop.f32.mrf.mxu0
    %1584 = vmatprep.mubr.f32.mxu0 %v271
    %1585 = vmatmul.mubr.f32.gmra.mxu0 %v270
    %v1586 = vpop.f32.mrf.mxu0
    %v1587 = vadd.f32 %v1442, %v1586
    %v1588 = vpop.f32.mrf.mxu0
    %1589 = vmatprep.mubr.f32.mxu0 %v273
    %1590 = vmatmul.mubr.f32.gmra.mxu0 %v272
    %v1591 = vpop.f32.mrf.mxu0
    %v1592 = vadd.f32 %v1447, %v1591
    %v1593 = vpop.f32.mrf.mxu0
    %1594 = vmatprep.mubr.f32.mxu0 %v275
    %1595 = vmatmul.mubr.f32.gmra.mxu0 %v274
    %v1596 = vpop.f32.mrf.mxu0
    %v1597 = vadd.f32 %v1452, %v1596
    %v1598 = vpop.f32.mrf.mxu0
    %1599 = vmatprep.mubr.f32.mxu0 %v277
    %1600 = vmatmul.mubr.f32.gmra.mxu0 %v276
    %v1601 = vpop.f32.mrf.mxu0
    %v1602 = vadd.f32 %v1457, %v1601
    %v1603 = vpop.f32.mrf.mxu0
    %1604 = vmatprep.mubr.f32.mxu0 %v279
    %1605 = vmatmul.mubr.f32.gmra.mxu0 %v278
    %v1606 = vpop.f32.mrf.mxu0
    %v1607 = vadd.f32 %v1462, %v1606
    %v1608 = vpop.f32.mrf.mxu0
    %1609 = vmatprep.mubr.f32.mxu0 %v281
    %1610 = vmatmul.mubr.f32.gmra.mxu0 %v280
    %v1611 = vpop.f32.mrf.mxu0
    %v1612 = vadd.f32 %v1467, %v1611
    %v1613 = vpop.f32.mrf.mxu0
    %1614 = vmatprep.mubr.f32.mxu0 %v283
    %1615 = vmatmul.mubr.f32.gmra.mxu0 %v282
    %v1616 = vpop.f32.mrf.mxu0
    %v1617 = vadd.f32 %v1472, %v1616
    %v1618 = vpop.f32.mrf.mxu0
    %1619 = vdwg.mxu0
    %v1620 = vld [vmem:[%s9] sm:$0x1]
    %v1622 = vlaneseq
    %v1623 = vshrl.u32 %v1622, 7
    %v1624 = vsub.s32 0, %v1623
    %v1625 = vrot.slane %v1620, %v1624
    %v1627 = vadd.f32 %v1542, %v1625
    %v1628 = vadd.f32 %v1547, %v1625
    %v1629 = vadd.f32 %v1552, %v1625
    %v1630 = vadd.f32 %v1557, %v1625
    %v1631 = vadd.f32 %v1562, %v1625
    %v1632 = vadd.f32 %v1567, %v1625
    %v1633 = vadd.f32 %v1572, %v1625
    %v1634 = vadd.f32 %v1577, %v1625
    %v1635 = vadd.f32 %v1582, %v1625
    %v1636 = vadd.f32 %v1587, %v1625
    %v1637 = vadd.f32 %v1592, %v1625
    %v1638 = vadd.f32 %v1597, %v1625
    %v1639 = vadd.f32 %v1602, %v1625
    %v1640 = vadd.f32 %v1607, %v1625
    %v1641 = vadd.f32 %v1612, %v1625
    %v1642 = vadd.f32 %v1617, %v1625
    %v1643 = vmax.f32 %v1627, 0.0
    %v1644 = vmax.f32 %v1628, 0.0
    %v1645 = vmax.f32 %v1629, 0.0
    %v1646 = vmax.f32 %v1630, 0.0
    %v1647 = vmax.f32 %v1631, 0.0
    %v1648 = vmax.f32 %v1632, 0.0
    %v1649 = vmax.f32 %v1633, 0.0
    %v1650 = vmax.f32 %v1634, 0.0
    %v1651 = vmax.f32 %v1635, 0.0
    %v1652 = vmax.f32 %v1636, 0.0
    %v1653 = vmax.f32 %v1637, 0.0
    %v1654 = vmax.f32 %v1638, 0.0
    %v1655 = vmax.f32 %v1639, 0.0
    %v1656 = vmax.f32 %v1640, 0.0
    %v1657 = vmax.f32 %v1641, 0.0
    %v1658 = vmax.f32 %v1642, 0.0
    %v1659 = vld [vmem:[#allocation10] sm:$0xff]
    %1660 = vmatprep.subr.mxu0 0.0
    %1661 = vmatpush1.msra.mxu0 %v1658
    %1662 = vmatprep.subr.mxu0 0.0
    %1663 = vmatpush1.msra.mxu0 %v1657
    %1664 = vmatprep.subr.mxu0 0.0
    %1665 = vmatpush1.msra.mxu0 %v1656
    %1666 = vmatprep.subr.mxu0 0.0
    %1667 = vmatpush1.msra.mxu0 %v1655
    %1668 = vmatprep.subr.mxu0 0.0
    %1669 = vmatpush1.msra.mxu0 %v1654
    %1670 = vmatprep.subr.mxu0 0.0
    %1671 = vmatpush1.msra.mxu0 %v1653
    %1672 = vmatprep.subr.mxu0 0.0
    %1673 = vmatpush1.msra.mxu0 %v1652
    %1674 = vmatprep.subr.mxu0 0.0
    %1675 = vmatpush1.msra.mxu0 %v1651
    %1676 = vmatprep.subr.mxu0 0.0
    %1677 = vmatpush1.msra.mxu0 %v1650
    %1678 = vmatprep.subr.mxu0 0.0
    %1679 = vmatpush1.msra.mxu0 %v1649
    %1680 = vmatprep.subr.mxu0 0.0
    %1681 = vmatpush1.msra.mxu0 %v1648
    %1682 = vmatprep.subr.mxu0 0.0
    %1683 = vmatpush1.msra.mxu0 %v1647
    %1684 = vmatprep.subr.mxu0 0.0
    %1685 = vmatpush1.msra.mxu0 %v1646
    %1686 = vmatprep.subr.mxu0 0.0
    %1687 = vmatpush1.msra.mxu0 %v1645
    %1688 = vmatprep.subr.mxu0 0.0
    %1689 = vmatpush1.msra.mxu0 %v1644
    %1690 = vmatprep.subr.mxu0 0.0
    %1691 = vmatpush1.msra.mxu0 %v1643
    %1692 = vmatprep.subr.mxu0 0.0
    %1693 = vmatpush2.msra.mxu0 0.0
    %1694 = vmatprep.subr.mxu0 0.0
    %1695 = vmatpush2.msra.mxu0 0.0
    %1696 = vmatprep.subr.mxu0 0.0
    %1697 = vmatpush2.msra.mxu0 0.0
    %1698 = vmatprep.subr.mxu0 0.0
    %1699 = vmatpush2.msra.mxu0 0.0
    %1700 = vmatprep.subr.mxu0 0.0
    %1701 = vmatpush2.msra.mxu0 0.0
    %1702 = vmatprep.subr.mxu0 0.0
    %1703 = vmatpush2.msra.mxu0 0.0
    %1704 = vmatprep.subr.mxu0 0.0
    %1705 = vmatpush2.msra.mxu0 0.0
    %1706 = vmatprep.subr.mxu0 0.0
    %1707 = vmatpush2.msra.mxu0 0.0
    %1708 = vmatprep.subr.mxu0 0.0
    %1709 = vmatpush2.msra.mxu0 0.0
    %1710 = vmatprep.subr.mxu0 0.0
    %1711 = vmatpush2.msra.mxu0 0.0
    %1712 = vmatprep.subr.mxu0 0.0
    %1713 = vmatpush2.msra.mxu0 0.0
    %1714 = vmatprep.subr.mxu0 0.0
    %1715 = vmatpush2.msra.mxu0 0.0
    %1716 = vmatprep.subr.mxu0 0.0
    %1717 = vmatpush2.msra.mxu0 0.0
    %1718 = vmatprep.subr.mxu0 0.0
    %1719 = vmatpush2.msra.mxu0 0.0
    %1720 = vmatprep.subr.mxu0 0.0
    %1721 = vmatpush2.msra.mxu0 0.0
    %1722 = vmatprep.subr.mxu0 0.0
    %1723 = vmatpush2.msra.mxu0 0.0
    %1724 = vmatprep.mubr.f32.mxu0 0.0
    %1725 = vmatmul.mubr.f32.gmra.mxu0 %v1659
    %v1726 = vpop.f32.mrf.mxu0
    %v1727 = vadd.f32 0.0, %v1726
    %v1728 = vpop.f32.mrf.mxu0
    %1729 = vdwg.mxu0
    %1730 = vst [vmem:[#allocation17] sm:$0xff] %v1727
    // Predicated region
    $region78: #{tpu_custom_call.1} parent=1 // pred_check
      _
    $region79: #{tpu_custom_call.1} parent=1 // pred_check_branch
      %1732 = sbr.rel (0) target = $region81
    $region80: #{tpu_custom_call.1} parent=1 // pred_region
      %s1734 = ssub.s32 128, 128
      %1735 = vsyncadd [#allocation4], %s1734
      %s1737 = sshll.u32 [#allocation17], 4
      %s1738 = int_to_ptr.vmem [resolvable:$true] %s1737
      %1740 = dma.vmem_to_hbm [thread:$0]  %s1738, 128, %s10, [#allocation4]
    $region81: #{tpu_custom_call.1} parent=1 // pred_fallthru
      _
    // Predicated region
    $region82: #{tpu_custom_call.1} parent=1 // pred_check
      _
    $region83: #{tpu_custom_call.1} parent=1 // pred_check_branch
      %1742 = sbr.rel (0) target = $region85
    $region84: #{tpu_custom_call.1} parent=1 // pred_region
      %1743 = dma.done [#allocation4], 128
    $region85: #{tpu_custom_call.1} parent=1 // pred_fallthru
      _
    %1744 = vsyncpa [#allocation3], 1
    %1745 = vsyncpa [#allocation6], 1
    %1746 = vsyncpa [#allocation9], 1
    %1747 = vsyncpa [#allocation12], 1
    %1748 = vsyncpa [#allocation15], 1
    %1749 = vsyncpa [#allocation4], 1

</llo_original>
